<compile_context>
chip_gen: v5e
topology: v5e:2x2
jax: 0.10.0
libtpu: 0.0.40
codegen_flags: <defaults>
</compile_context>

<pallas_src>
import functools

import jax
import jax.numpy as jnp
from jax.experimental import pallas as pl
from jax.experimental.pallas import tpu as pltpu

_LANE = 128
_ISSUE_UNROLL = 8
# Combined padded-table bytes below this are kept VMEM-resident for the whole
# kernel.  Conservative so the default scoped-VMEM limit is enough even on
# v5e (16 MiB scoped default) with possible input double-buffering.
_VMEM_TABLE_BYTES = 4 * 1024 * 1024


def _round_up(x, m):
    return ((x + m - 1) // m) * m


def mf_gather_kernel(users_sm, items_sm, utab, itab, out_ref,
                     u_buf, v_buf, sems, *, sub_tile, num_chunks):
    """One grid step produces a (1, TB) output slab, TB = num_chunks * sub_tile.

    users_sm/items_sm : (B_pad,) int32 ids in SMEM (scalar prefetch)
    utab / itab       : (NU, E_pad)/(NI, E_pad) f32 tables (VMEM-resident block
                        for small tables, raw HBM ref via pl.ANY otherwise)
    out_ref           : (1, TB) f32 VMEM output block (lane dense)
    u_buf / v_buf     : (2, sub_tile, E_pad) f32 double-buffered gather scratch
    sems              : (2, 2) DMA semaphores, indexed [slot, table]
    """
    sc = sub_tile
    t = pl.program_id(0)
    base = t * (num_chunks * sc)

    def issue(chunk, slot):
        # Gather the `sc` user/item rows of `chunk` into buffer `slot`.
        off = base + chunk * sc

        @pl.loop(0, sc // _ISSUE_UNROLL)
        def _issue_group(g):
            rr = g * _ISSUE_UNROLL
            for j in range(_ISSUE_UNROLL):   # unrolled: keep descriptor slot fed
                r = rr + j
                uid = users_sm[off + r]
                iid = items_sm[off + r]
                pltpu.make_async_copy(
                    utab.at[pl.ds(uid, 1), :],
                    u_buf.at[slot, pl.ds(r, 1), :],
                    sems.at[slot, 0]).start()
                pltpu.make_async_copy(
                    itab.at[pl.ds(iid, 1), :],
                    v_buf.at[slot, pl.ds(r, 1), :],
                    sems.at[slot, 1]).start()

    def drain(slot):
        # DMA semaphores count bytes: one (sc, E_pad)-sized wait per table
        # drains all `sc` row copies issued into `slot`.  The descriptor refs
        # only size the wait (no data moves here).
        pltpu.make_async_copy(u_buf.at[slot], u_buf.at[slot], sems.at[slot, 0]).wait()
        pltpu.make_async_copy(v_buf.at[slot], v_buf.at[slot], sems.at[slot, 1]).wait()

    issue(0, 0)                               # prime slot 0
    for c in range(num_chunks):               # static loop: slots stay compile-time
        slot = c % 2
        if c + 1 < num_chunks:                # prefetch next chunk into other slot
            issue(c + 1, (c + 1) % 2)
        drain(slot)
        u = u_buf[slot]                        # (sc, E_pad)
        v = v_buf[slot]
        dot = jnp.sum(u * v, axis=-1)          # VPU multiply + XLU lane reduce
        out_ref[0:1, c * sc:(c + 1) * sc] = jax.nn.sigmoid(dot).reshape(1, sc)


def prepare_mf_tables(user_table, item_table):
    """One-time (init-time) cast + lane padding of the embedding tables.

    Done outside the per-step forward so the full-table pad/cast HBM traffic
    is never paid per call.  Zero pad columns contribute 0 to the dot product.
    """
    e = user_table.shape[1]
    assert item_table.shape[1] == e
    e_pad = _round_up(e, _LANE)
    utab = jnp.pad(user_table.astype(jnp.float32), ((0, 0), (0, e_pad - e)))
    itab = jnp.pad(item_table.astype(jnp.float32), ((0, 0), (0, e_pad - e)))
    return utab, itab


@functools.partial(jax.jit, static_argnames=("max_batch_tile", "force_hbm_tables"))
def mf_forward(users, items, utab, itab, *, max_batch_tile=512,
               force_hbm_tables=False):
    """sigmoid(sum(user_table[users] * item_table[items], axis=1)) -> (B,)."""
    B = users.shape[0]
    NU, e_pad = utab.shape
    NI, e_pad_i = itab.shape
    assert e_pad_i == e_pad and e_pad % _LANE == 0

    # Large tiles amortize per-grid-step overhead; don't over-pad tiny batches.
    batch_tile = min(max_batch_tile, _round_up(max(B, 1), _LANE))
    batch_tile = _round_up(batch_tile, _LANE)
    sub_tile = _LANE
    assert batch_tile % sub_tile == 0 and sub_tile % _ISSUE_UNROLL == 0
    num_chunks = batch_tile // sub_tile
    b_pad = _round_up(B, batch_tile)
    num_tiles = b_pad // batch_tile

    # torch.nn.Embedding would raise on out-of-range ids; clamp since the DMA
    # gather has no bounds check.  Padded batch rows gather row 0 (sliced off).
    users_p = jnp.pad(jnp.clip(users.astype(jnp.int32), 0, NU - 1), (0, b_pad - B))
    items_p = jnp.pad(jnp.clip(items.astype(jnp.int32), 0, NI - 1), (0, b_pad - B))

    table_bytes = (NU + NI) * e_pad * 4
    vmem_tables = (not force_hbm_tables) and table_bytes <= _VMEM_TABLE_BYTES
    if vmem_tables:
        # Whole table resident in VMEM (constant block index -> fetched once).
        u_spec = pl.BlockSpec((NU, e_pad), lambda t, u_sm, i_sm: (0, 0))
        i_spec = pl.BlockSpec((NI, e_pad), lambda t, u_sm, i_sm: (0, 0))
        bytes_accessed = table_bytes + 2 * b_pad * 4 + b_pad * 4
    else:
        # Tables stay in HBM; only the gathered rows ever move.
        u_spec = pl.BlockSpec(memory_space=pl.ANY)
        i_spec = pl.BlockSpec(memory_space=pl.ANY)
        bytes_accessed = 2 * b_pad * e_pad * 4 + 2 * b_pad * 4 + b_pad * 4

    kernel = functools.partial(mf_gather_kernel, sub_tile=sub_tile,
                               num_chunks=num_chunks)
    cost = pl.CostEstimate(flops=2 * b_pad * e_pad,
                           transcendentals=b_pad,
                           bytes_accessed=bytes_accessed)

    out = pl.pallas_call(
        kernel,
        out_shape=jax.ShapeDtypeStruct((1, b_pad), jnp.float32),
        grid_spec=pltpu.PrefetchScalarGridSpec(
            num_scalar_prefetch=2,              # users_p, items_p -> SMEM
            grid=(num_tiles,),
            in_specs=[u_spec, i_spec],
            out_specs=pl.BlockSpec((1, batch_tile), lambda t, u_sm, i_sm: (0, t)),
            scratch_shapes=[
                pltpu.VMEM((2, sub_tile, e_pad), jnp.float32),
                pltpu.VMEM((2, sub_tile, e_pad), jnp.float32),
                pltpu.SemaphoreType.DMA((2, 2)),
            ],
        ),
        compiler_params=pltpu.CompilerParams(
            dimension_semantics=("parallel",)),
        cost_estimate=cost,
    )(users_p, items_p, utab, itab)
    return out[0, :B]


def mf_reference(users, items, user_table, item_table):
    u = user_table[users]
    v = item_table[items]
    return jax.nn.sigmoid(jnp.sum(u * v, axis=1))


if __name__ == "__main__":
    key = jax.random.PRNGKey(0)

    # --- Test 1: module-sized config (VMEM-resident-table fast path) ---------
    embedding_size = 50
    num_users, num_items, batch = 64, 64, 8
    k_u, k_i, k_uid, k_iid, key = jax.random.split(key, 5)
    user_table = jax.random.normal(k_u, (num_users, embedding_size), jnp.float32)
    item_table = jax.random.normal(k_i, (num_items, embedding_size), jnp.float32)
    users = jax.random.randint(k_uid, (batch,), 0, num_users, dtype=jnp.int32)
    items = jax.random.randint(k_iid, (batch,), 0, num_items, dtype=jnp.int32)

    utab, itab = prepare_mf_tables(user_table, item_table)   # init-time, not per call
    out = jax.block_until_ready(mf_forward(users, items, utab, itab))
    ref = mf_reference(users, items, user_table, item_table)
    assert out.shape == (batch,)
    assert jnp.allclose(out, ref, atol=1e-5, rtol=1e-5), (out, ref)

    # --- Test 2: HBM gather path (forced) with multi-tile, double-buffered ----
    num_users2, num_items2, batch2 = 300, 300, 1000
    k_u2, k_i2, k_uid2, k_iid2, key = jax.random.split(key, 5)
    user_table2 = jax.random.normal(k_u2, (num_users2, embedding_size), jnp.float32)
    item_table2 = jax.random.normal(k_i2, (num_items2, embedding_size), jnp.float32)
    users2 = jax.random.randint(k_uid2, (batch2,), 0, num_users2, dtype=jnp.int32)
    items2 = jax.random.randint(k_iid2, (batch2,), 0, num_items2, dtype=jnp.int32)

    utab2, itab2 = prepare_mf_tables(user_table2, item_table2)
    out2 = jax.block_until_ready(
        mf_forward(users2, items2, utab2, itab2, force_hbm_tables=True))
    ref2 = mf_reference(users2, items2, user_table2, item_table2)
    assert out2.shape == (batch2,)
    assert jnp.allclose(out2, ref2, atol=1e-5, rtol=1e-5)

    print("KERNEL_OK")
</pallas_src>

<mosaic_0001>
module attributes {stable_mosaic.version = 11 : i64} {
  func.func @mf_gather_kernel(%arg0: i32, %arg1: memref<128xi32, #tpu.memory_space<smem>>, %arg2: memref<128xi32, #tpu.memory_space<smem>>, %arg3: memref<64x128xf32, #tpu.memory_space<vmem>>, %arg4: memref<64x128xf32, #tpu.memory_space<vmem>>, %arg5: memref<1x128xf32, #tpu.memory_space<vmem>>, %arg6: memref<2x128x128xf32, #tpu.memory_space<vmem>>, %arg7: memref<2x128x128xf32, #tpu.memory_space<vmem>>, %arg8: memref<2x2x!tpu.dma_semaphore, #tpu.memory_space<semaphore_mem>>) attributes {dimension_semantics = [#tpu.dimension_semantics<parallel>], iteration_bounds = array<i64: 1>, scalar_prefetch = 2 : i64, scratch_operands = 3 : i64, tpu.core_type = #tpu.core_type<tc>, window_params = [{pipeline_mode = #tpu.pipeline_mode<synchronous>, transform_indices = @transform_0, window_bounds = array<i64: 64, 128>}, {pipeline_mode = #tpu.pipeline_mode<synchronous>, transform_indices = @transform_1, window_bounds = array<i64: 64, 128>}, {transform_indices = @transform_2, window_bounds = array<i64: 1, 128>}]} {
    %c128_i32 = arith.constant 128 : i32
    %0 = arith.muli %arg0, %c128_i32 : i32
    %c0_i32 = arith.constant 0 : i32
    %1 = arith.addi %0, %c0_i32 : i32
    %c0_i32_0 = arith.constant 0 : i32
    %c16_i32 = arith.constant 16 : i32
    %2 = arith.addi %c0_i32_0, %c16_i32 : i32
    %c1_i32 = arith.constant 1 : i32
    scf.for %arg9 = %c0_i32_0 to %2 step %c1_i32  : i32 {
      %c1_i32_26 = arith.constant 1 : i32
      %28 = arith.muli %arg9, %c1_i32_26 : i32
      %c0_i32_27 = arith.constant 0 : i32
      %29 = arith.addi %c0_i32_27, %28 : i32
      %c8_i32 = arith.constant 8 : i32
      %30 = arith.muli %29, %c8_i32 : i32
      %c0_i32_28 = arith.constant 0 : i32
      %31 = arith.addi %30, %c0_i32_28 : i32
      %32 = arith.addi %1, %31 : i32
      %33 = arith.index_cast %32 : i32 to index
      %34 = memref.load %arg1[%33] : memref<128xi32, #tpu.memory_space<smem>>
      %35 = arith.addi %1, %31 : i32
      %36 = arith.index_cast %35 : i32 to index
      %37 = memref.load %arg2[%36] : memref<128xi32, #tpu.memory_space<smem>>
      %c0_i32_29 = arith.constant 0 : i32
      %c0_i32_30 = arith.constant 0 : i32
      %c0_i32_31 = arith.constant 0 : i32
      %c0_i32_32 = arith.constant 0 : i32
      %38 = tpu.memref_slice %arg3[%34, %c0_i32_32] : memref<64x128xf32, #tpu.memory_space<vmem>> -> memref<1x128xf32, #tpu.memory_space<vmem>>
      %c0_i32_33 = arith.constant 0 : i32
      %39 = tpu.memref_slice %arg6[%c0_i32_29, %31, %c0_i32_33] : memref<2x128x128xf32, #tpu.memory_space<vmem>> -> memref<1x1x128xf32, #tpu.memory_space<vmem>>
      %40 = tpu.memref_squeeze %39 : memref<1x1x128xf32, #tpu.memory_space<vmem>> -> memref<1x128xf32, #tpu.memory_space<vmem>>
      %41 = tpu.memref_slice %arg8[%c0_i32_30, %c0_i32_31] : memref<2x2x!tpu.dma_semaphore, #tpu.memory_space<semaphore_mem>> -> memref<1x1x!tpu.dma_semaphore, #tpu.memory_space<semaphore_mem>>
      %42 = tpu.memref_squeeze %41 : memref<1x1x!tpu.dma_semaphore, #tpu.memory_space<semaphore_mem>> -> memref<!tpu.dma_semaphore, #tpu.memory_space<semaphore_mem>>
      tpu.enqueue_dma source(%38 : memref<1x128xf32, #tpu.memory_space<vmem>>) target(%40 : memref<1x128xf32, #tpu.memory_space<vmem>>) target_semaphore(%42 : memref<!tpu.dma_semaphore, #tpu.memory_space<semaphore_mem>>)
      %c0_i32_34 = arith.constant 0 : i32
      %c0_i32_35 = arith.constant 0 : i32
      %c1_i32_36 = arith.constant 1 : i32
      %c0_i32_37 = arith.constant 0 : i32
      %43 = tpu.memref_slice %arg4[%37, %c0_i32_37] : memref<64x128xf32, #tpu.memory_space<vmem>> -> memref<1x128xf32, #tpu.memory_space<vmem>>
      %c0_i32_38 = arith.constant 0 : i32
      %44 = tpu.memref_slice %arg7[%c0_i32_34, %31, %c0_i32_38] : memref<2x128x128xf32, #tpu.memory_space<vmem>> -> memref<1x1x128xf32, #tpu.memory_space<vmem>>
      %45 = tpu.memref_squeeze %44 : memref<1x1x128xf32, #tpu.memory_space<vmem>> -> memref<1x128xf32, #tpu.memory_space<vmem>>
      %46 = tpu.memref_slice %arg8[%c0_i32_35, %c1_i32_36] : memref<2x2x!tpu.dma_semaphore, #tpu.memory_space<semaphore_mem>> -> memref<1x1x!tpu.dma_semaphore, #tpu.memory_space<semaphore_mem>>
      %47 = tpu.memref_squeeze %46 : memref<1x1x!tpu.dma_semaphore, #tpu.memory_space<semaphore_mem>> -> memref<!tpu.dma_semaphore, #tpu.memory_space<semaphore_mem>>
      tpu.enqueue_dma source(%43 : memref<1x128xf32, #tpu.memory_space<vmem>>) target(%45 : memref<1x128xf32, #tpu.memory_space<vmem>>) target_semaphore(%47 : memref<!tpu.dma_semaphore, #tpu.memory_space<semaphore_mem>>)
      %c1_i32_39 = arith.constant 1 : i32
      %48 = arith.addi %30, %c1_i32_39 : i32
      %49 = arith.addi %1, %48 : i32
      %50 = arith.index_cast %49 : i32 to index
      %51 = memref.load %arg1[%50] : memref<128xi32, #tpu.memory_space<smem>>
      %52 = arith.addi %1, %48 : i32
      %53 = arith.index_cast %52 : i32 to index
      %54 = memref.load %arg2[%53] : memref<128xi32, #tpu.memory_space<smem>>
      %c0_i32_40 = arith.constant 0 : i32
      %c0_i32_41 = arith.constant 0 : i32
      %c0_i32_42 = arith.constant 0 : i32
      %c0_i32_43 = arith.constant 0 : i32
      %55 = tpu.memref_slice %arg3[%51, %c0_i32_43] : memref<64x128xf32, #tpu.memory_space<vmem>> -> memref<1x128xf32, #tpu.memory_space<vmem>>
      %c0_i32_44 = arith.constant 0 : i32
      %56 = tpu.memref_slice %arg6[%c0_i32_40, %48, %c0_i32_44] : memref<2x128x128xf32, #tpu.memory_space<vmem>> -> memref<1x1x128xf32, #tpu.memory_space<vmem>>
      %57 = tpu.memref_squeeze %56 : memref<1x1x128xf32, #tpu.memory_space<vmem>> -> memref<1x128xf32, #tpu.memory_space<vmem>>
      %58 = tpu.memref_slice %arg8[%c0_i32_41, %c0_i32_42] : memref<2x2x!tpu.dma_semaphore, #tpu.memory_space<semaphore_mem>> -> memref<1x1x!tpu.dma_semaphore, #tpu.memory_space<semaphore_mem>>
      %59 = tpu.memref_squeeze %58 : memref<1x1x!tpu.dma_semaphore, #tpu.memory_space<semaphore_mem>> -> memref<!tpu.dma_semaphore, #tpu.memory_space<semaphore_mem>>
      tpu.enqueue_dma source(%55 : memref<1x128xf32, #tpu.memory_space<vmem>>) target(%57 : memref<1x128xf32, #tpu.memory_space<vmem>>) target_semaphore(%59 : memref<!tpu.dma_semaphore, #tpu.memory_space<semaphore_mem>>)
      %c0_i32_45 = arith.constant 0 : i32
      %c0_i32_46 = arith.constant 0 : i32
      %c1_i32_47 = arith.constant 1 : i32
      %c0_i32_48 = arith.constant 0 : i32
      %60 = tpu.memref_slice %arg4[%54, %c0_i32_48] : memref<64x128xf32, #tpu.memory_space<vmem>> -> memref<1x128xf32, #tpu.memory_space<vmem>>
      %c0_i32_49 = arith.constant 0 : i32
      %61 = tpu.memref_slice %arg7[%c0_i32_45, %48, %c0_i32_49] : memref<2x128x128xf32, #tpu.memory_space<vmem>> -> memref<1x1x128xf32, #tpu.memory_space<vmem>>
      %62 = tpu.memref_squeeze %61 : memref<1x1x128xf32, #tpu.memory_space<vmem>> -> memref<1x128xf32, #tpu.memory_space<vmem>>
      %63 = tpu.memref_slice %arg8[%c0_i32_46, %c1_i32_47] : memref<2x2x!tpu.dma_semaphore, #tpu.memory_space<semaphore_mem>> -> memref<1x1x!tpu.dma_semaphore, #tpu.memory_space<semaphore_mem>>
      %64 = tpu.memref_squeeze %63 : memref<1x1x!tpu.dma_semaphore, #tpu.memory_space<semaphore_mem>> -> memref<!tpu.dma_semaphore, #tpu.memory_space<semaphore_mem>>
      tpu.enqueue_dma source(%60 : memref<1x128xf32, #tpu.memory_space<vmem>>) target(%62 : memref<1x128xf32, #tpu.memory_space<vmem>>) target_semaphore(%64 : memref<!tpu.dma_semaphore, #tpu.memory_space<semaphore_mem>>)
      %c2_i32 = arith.constant 2 : i32
      %65 = arith.addi %30, %c2_i32 : i32
      %66 = arith.addi %1, %65 : i32
      %67 = arith.index_cast %66 : i32 to index
      %68 = memref.load %arg1[%67] : memref<128xi32, #tpu.memory_space<smem>>
      %69 = arith.addi %1, %65 : i32
      %70 = arith.index_cast %69 : i32 to index
      %71 = memref.load %arg2[%70] : memref<128xi32, #tpu.memory_space<smem>>
      %c0_i32_50 = arith.constant 0 : i32
      %c0_i32_51 = arith.constant 0 : i32
      %c0_i32_52 = arith.constant 0 : i32
      %c0_i32_53 = arith.constant 0 : i32
      %72 = tpu.memref_slice %arg3[%68, %c0_i32_53] : memref<64x128xf32, #tpu.memory_space<vmem>> -> memref<1x128xf32, #tpu.memory_space<vmem>>
      %c0_i32_54 = arith.constant 0 : i32
      %73 = tpu.memref_slice %arg6[%c0_i32_50, %65, %c0_i32_54] : memref<2x128x128xf32, #tpu.memory_space<vmem>> -> memref<1x1x128xf32, #tpu.memory_space<vmem>>
      %74 = tpu.memref_squeeze %73 : memref<1x1x128xf32, #tpu.memory_space<vmem>> -> memref<1x128xf32, #tpu.memory_space<vmem>>
      %75 = tpu.memref_slice %arg8[%c0_i32_51, %c0_i32_52] : memref<2x2x!tpu.dma_semaphore, #tpu.memory_space<semaphore_mem>> -> memref<1x1x!tpu.dma_semaphore, #tpu.memory_space<semaphore_mem>>
      %76 = tpu.memref_squeeze %75 : memref<1x1x!tpu.dma_semaphore, #tpu.memory_space<semaphore_mem>> -> memref<!tpu.dma_semaphore, #tpu.memory_space<semaphore_mem>>
      tpu.enqueue_dma source(%72 : memref<1x128xf32, #tpu.memory_space<vmem>>) target(%74 : memref<1x128xf32, #tpu.memory_space<vmem>>) target_semaphore(%76 : memref<!tpu.dma_semaphore, #tpu.memory_space<semaphore_mem>>)
      %c0_i32_55 = arith.constant 0 : i32
      %c0_i32_56 = arith.constant 0 : i32
      %c1_i32_57 = arith.constant 1 : i32
      %c0_i32_58 = arith.constant 0 : i32
      %77 = tpu.memref_slice %arg4[%71, %c0_i32_58] : memref<64x128xf32, #tpu.memory_space<vmem>> -> memref<1x128xf32, #tpu.memory_space<vmem>>
      %c0_i32_59 = arith.constant 0 : i32
      %78 = tpu.memref_slice %arg7[%c0_i32_55, %65, %c0_i32_59] : memref<2x128x128xf32, #tpu.memory_space<vmem>> -> memref<1x1x128xf32, #tpu.memory_space<vmem>>
      %79 = tpu.memref_squeeze %78 : memref<1x1x128xf32, #tpu.memory_space<vmem>> -> memref<1x128xf32, #tpu.memory_space<vmem>>
      %80 = tpu.memref_slice %arg8[%c0_i32_56, %c1_i32_57] : memref<2x2x!tpu.dma_semaphore, #tpu.memory_space<semaphore_mem>> -> memref<1x1x!tpu.dma_semaphore, #tpu.memory_space<semaphore_mem>>
      %81 = tpu.memref_squeeze %80 : memref<1x1x!tpu.dma_semaphore, #tpu.memory_space<semaphore_mem>> -> memref<!tpu.dma_semaphore, #tpu.memory_space<semaphore_mem>>
      tpu.enqueue_dma source(%77 : memref<1x128xf32, #tpu.memory_space<vmem>>) target(%79 : memref<1x128xf32, #tpu.memory_space<vmem>>) target_semaphore(%81 : memref<!tpu.dma_semaphore, #tpu.memory_space<semaphore_mem>>)
      %c3_i32 = arith.constant 3 : i32
      %82 = arith.addi %30, %c3_i32 : i32
      %83 = arith.addi %1, %82 : i32
      %84 = arith.index_cast %83 : i32 to index
      %85 = memref.load %arg1[%84] : memref<128xi32, #tpu.memory_space<smem>>
      %86 = arith.addi %1, %82 : i32
      %87 = arith.index_cast %86 : i32 to index
      %88 = memref.load %arg2[%87] : memref<128xi32, #tpu.memory_space<smem>>
      %c0_i32_60 = arith.constant 0 : i32
      %c0_i32_61 = arith.constant 0 : i32
      %c0_i32_62 = arith.constant 0 : i32
      %c0_i32_63 = arith.constant 0 : i32
      %89 = tpu.memref_slice %arg3[%85, %c0_i32_63] : memref<64x128xf32, #tpu.memory_space<vmem>> -> memref<1x128xf32, #tpu.memory_space<vmem>>
      %c0_i32_64 = arith.constant 0 : i32
      %90 = tpu.memref_slice %arg6[%c0_i32_60, %82, %c0_i32_64] : memref<2x128x128xf32, #tpu.memory_space<vmem>> -> memref<1x1x128xf32, #tpu.memory_space<vmem>>
      %91 = tpu.memref_squeeze %90 : memref<1x1x128xf32, #tpu.memory_space<vmem>> -> memref<1x128xf32, #tpu.memory_space<vmem>>
      %92 = tpu.memref_slice %arg8[%c0_i32_61, %c0_i32_62] : memref<2x2x!tpu.dma_semaphore, #tpu.memory_space<semaphore_mem>> -> memref<1x1x!tpu.dma_semaphore, #tpu.memory_space<semaphore_mem>>
      %93 = tpu.memref_squeeze %92 : memref<1x1x!tpu.dma_semaphore, #tpu.memory_space<semaphore_mem>> -> memref<!tpu.dma_semaphore, #tpu.memory_space<semaphore_mem>>
      tpu.enqueue_dma source(%89 : memref<1x128xf32, #tpu.memory_space<vmem>>) target(%91 : memref<1x128xf32, #tpu.memory_space<vmem>>) target_semaphore(%93 : memref<!tpu.dma_semaphore, #tpu.memory_space<semaphore_mem>>)
      %c0_i32_65 = arith.constant 0 : i32
      %c0_i32_66 = arith.constant 0 : i32
      %c1_i32_67 = arith.constant 1 : i32
      %c0_i32_68 = arith.constant 0 : i32
      %94 = tpu.memref_slice %arg4[%88, %c0_i32_68] : memref<64x128xf32, #tpu.memory_space<vmem>> -> memref<1x128xf32, #tpu.memory_space<vmem>>
      %c0_i32_69 = arith.constant 0 : i32
      %95 = tpu.memref_slice %arg7[%c0_i32_65, %82, %c0_i32_69] : memref<2x128x128xf32, #tpu.memory_space<vmem>> -> memref<1x1x128xf32, #tpu.memory_space<vmem>>
      %96 = tpu.memref_squeeze %95 : memref<1x1x128xf32, #tpu.memory_space<vmem>> -> memref<1x128xf32, #tpu.memory_space<vmem>>
      %97 = tpu.memref_slice %arg8[%c0_i32_66, %c1_i32_67] : memref<2x2x!tpu.dma_semaphore, #tpu.memory_space<semaphore_mem>> -> memref<1x1x!tpu.dma_semaphore, #tpu.memory_space<semaphore_mem>>
      %98 = tpu.memref_squeeze %97 : memref<1x1x!tpu.dma_semaphore, #tpu.memory_space<semaphore_mem>> -> memref<!tpu.dma_semaphore, #tpu.memory_space<semaphore_mem>>
      tpu.enqueue_dma source(%94 : memref<1x128xf32, #tpu.memory_space<vmem>>) target(%96 : memref<1x128xf32, #tpu.memory_space<vmem>>) target_semaphore(%98 : memref<!tpu.dma_semaphore, #tpu.memory_space<semaphore_mem>>)
      %c4_i32 = arith.constant 4 : i32
      %99 = arith.addi %30, %c4_i32 : i32
      %100 = arith.addi %1, %99 : i32
      %101 = arith.index_cast %100 : i32 to index
      %102 = memref.load %arg1[%101] : memref<128xi32, #tpu.memory_space<smem>>
      %103 = arith.addi %1, %99 : i32
      %104 = arith.index_cast %103 : i32 to index
      %105 = memref.load %arg2[%104] : memref<128xi32, #tpu.memory_space<smem>>
      %c0_i32_70 = arith.constant 0 : i32
      %c0_i32_71 = arith.constant 0 : i32
      %c0_i32_72 = arith.constant 0 : i32
      %c0_i32_73 = arith.constant 0 : i32
      %106 = tpu.memref_slice %arg3[%102, %c0_i32_73] : memref<64x128xf32, #tpu.memory_space<vmem>> -> memref<1x128xf32, #tpu.memory_space<vmem>>
      %c0_i32_74 = arith.constant 0 : i32
      %107 = tpu.memref_slice %arg6[%c0_i32_70, %99, %c0_i32_74] : memref<2x128x128xf32, #tpu.memory_space<vmem>> -> memref<1x1x128xf32, #tpu.memory_space<vmem>>
      %108 = tpu.memref_squeeze %107 : memref<1x1x128xf32, #tpu.memory_space<vmem>> -> memref<1x128xf32, #tpu.memory_space<vmem>>
      %109 = tpu.memref_slice %arg8[%c0_i32_71, %c0_i32_72] : memref<2x2x!tpu.dma_semaphore, #tpu.memory_space<semaphore_mem>> -> memref<1x1x!tpu.dma_semaphore, #tpu.memory_space<semaphore_mem>>
      %110 = tpu.memref_squeeze %109 : memref<1x1x!tpu.dma_semaphore, #tpu.memory_space<semaphore_mem>> -> memref<!tpu.dma_semaphore, #tpu.memory_space<semaphore_mem>>
      tpu.enqueue_dma source(%106 : memref<1x128xf32, #tpu.memory_space<vmem>>) target(%108 : memref<1x128xf32, #tpu.memory_space<vmem>>) target_semaphore(%110 : memref<!tpu.dma_semaphore, #tpu.memory_space<semaphore_mem>>)
      %c0_i32_75 = arith.constant 0 : i32
      %c0_i32_76 = arith.constant 0 : i32
      %c1_i32_77 = arith.constant 1 : i32
      %c0_i32_78 = arith.constant 0 : i32
      %111 = tpu.memref_slice %arg4[%105, %c0_i32_78] : memref<64x128xf32, #tpu.memory_space<vmem>> -> memref<1x128xf32, #tpu.memory_space<vmem>>
      %c0_i32_79 = arith.constant 0 : i32
      %112 = tpu.memref_slice %arg7[%c0_i32_75, %99, %c0_i32_79] : memref<2x128x128xf32, #tpu.memory_space<vmem>> -> memref<1x1x128xf32, #tpu.memory_space<vmem>>
      %113 = tpu.memref_squeeze %112 : memref<1x1x128xf32, #tpu.memory_space<vmem>> -> memref<1x128xf32, #tpu.memory_space<vmem>>
      %114 = tpu.memref_slice %arg8[%c0_i32_76, %c1_i32_77] : memref<2x2x!tpu.dma_semaphore, #tpu.memory_space<semaphore_mem>> -> memref<1x1x!tpu.dma_semaphore, #tpu.memory_space<semaphore_mem>>
      %115 = tpu.memref_squeeze %114 : memref<1x1x!tpu.dma_semaphore, #tpu.memory_space<semaphore_mem>> -> memref<!tpu.dma_semaphore, #tpu.memory_space<semaphore_mem>>
      tpu.enqueue_dma source(%111 : memref<1x128xf32, #tpu.memory_space<vmem>>) target(%113 : memref<1x128xf32, #tpu.memory_space<vmem>>) target_semaphore(%115 : memref<!tpu.dma_semaphore, #tpu.memory_space<semaphore_mem>>)
      %c5_i32 = arith.constant 5 : i32
      %116 = arith.addi %30, %c5_i32 : i32
      %117 = arith.addi %1, %116 : i32
      %118 = arith.index_cast %117 : i32 to index
      %119 = memref.load %arg1[%118] : memref<128xi32, #tpu.memory_space<smem>>
      %120 = arith.addi %1, %116 : i32
      %121 = arith.index_cast %120 : i32 to index
      %122 = memref.load %arg2[%121] : memref<128xi32, #tpu.memory_space<smem>>
      %c0_i32_80 = arith.constant 0 : i32
      %c0_i32_81 = arith.constant 0 : i32
      %c0_i32_82 = arith.constant 0 : i32
      %c0_i32_83 = arith.constant 0 : i32
      %123 = tpu.memref_slice %arg3[%119, %c0_i32_83] : memref<64x128xf32, #tpu.memory_space<vmem>> -> memref<1x128xf32, #tpu.memory_space<vmem>>
      %c0_i32_84 = arith.constant 0 : i32
      %124 = tpu.memref_slice %arg6[%c0_i32_80, %116, %c0_i32_84] : memref<2x128x128xf32, #tpu.memory_space<vmem>> -> memref<1x1x128xf32, #tpu.memory_space<vmem>>
      %125 = tpu.memref_squeeze %124 : memref<1x1x128xf32, #tpu.memory_space<vmem>> -> memref<1x128xf32, #tpu.memory_space<vmem>>
      %126 = tpu.memref_slice %arg8[%c0_i32_81, %c0_i32_82] : memref<2x2x!tpu.dma_semaphore, #tpu.memory_space<semaphore_mem>> -> memref<1x1x!tpu.dma_semaphore, #tpu.memory_space<semaphore_mem>>
      %127 = tpu.memref_squeeze %126 : memref<1x1x!tpu.dma_semaphore, #tpu.memory_space<semaphore_mem>> -> memref<!tpu.dma_semaphore, #tpu.memory_space<semaphore_mem>>
      tpu.enqueue_dma source(%123 : memref<1x128xf32, #tpu.memory_space<vmem>>) target(%125 : memref<1x128xf32, #tpu.memory_space<vmem>>) target_semaphore(%127 : memref<!tpu.dma_semaphore, #tpu.memory_space<semaphore_mem>>)
      %c0_i32_85 = arith.constant 0 : i32
      %c0_i32_86 = arith.constant 0 : i32
      %c1_i32_87 = arith.constant 1 : i32
      %c0_i32_88 = arith.constant 0 : i32
      %128 = tpu.memref_slice %arg4[%122, %c0_i32_88] : memref<64x128xf32, #tpu.memory_space<vmem>> -> memref<1x128xf32, #tpu.memory_space<vmem>>
      %c0_i32_89 = arith.constant 0 : i32
      %129 = tpu.memref_slice %arg7[%c0_i32_85, %116, %c0_i32_89] : memref<2x128x128xf32, #tpu.memory_space<vmem>> -> memref<1x1x128xf32, #tpu.memory_space<vmem>>
      %130 = tpu.memref_squeeze %129 : memref<1x1x128xf32, #tpu.memory_space<vmem>> -> memref<1x128xf32, #tpu.memory_space<vmem>>
      %131 = tpu.memref_slice %arg8[%c0_i32_86, %c1_i32_87] : memref<2x2x!tpu.dma_semaphore, #tpu.memory_space<semaphore_mem>> -> memref<1x1x!tpu.dma_semaphore, #tpu.memory_space<semaphore_mem>>
      %132 = tpu.memref_squeeze %131 : memref<1x1x!tpu.dma_semaphore, #tpu.memory_space<semaphore_mem>> -> memref<!tpu.dma_semaphore, #tpu.memory_space<semaphore_mem>>
      tpu.enqueue_dma source(%128 : memref<1x128xf32, #tpu.memory_space<vmem>>) target(%130 : memref<1x128xf32, #tpu.memory_space<vmem>>) target_semaphore(%132 : memref<!tpu.dma_semaphore, #tpu.memory_space<semaphore_mem>>)
      %c6_i32 = arith.constant 6 : i32
      %133 = arith.addi %30, %c6_i32 : i32
      %134 = arith.addi %1, %133 : i32
      %135 = arith.index_cast %134 : i32 to index
      %136 = memref.load %arg1[%135] : memref<128xi32, #tpu.memory_space<smem>>
      %137 = arith.addi %1, %133 : i32
      %138 = arith.index_cast %137 : i32 to index
      %139 = memref.load %arg2[%138] : memref<128xi32, #tpu.memory_space<smem>>
      %c0_i32_90 = arith.constant 0 : i32
      %c0_i32_91 = arith.constant 0 : i32
      %c0_i32_92 = arith.constant 0 : i32
      %c0_i32_93 = arith.constant 0 : i32
      %140 = tpu.memref_slice %arg3[%136, %c0_i32_93] : memref<64x128xf32, #tpu.memory_space<vmem>> -> memref<1x128xf32, #tpu.memory_space<vmem>>
      %c0_i32_94 = arith.constant 0 : i32
      %141 = tpu.memref_slice %arg6[%c0_i32_90, %133, %c0_i32_94] : memref<2x128x128xf32, #tpu.memory_space<vmem>> -> memref<1x1x128xf32, #tpu.memory_space<vmem>>
      %142 = tpu.memref_squeeze %141 : memref<1x1x128xf32, #tpu.memory_space<vmem>> -> memref<1x128xf32, #tpu.memory_space<vmem>>
      %143 = tpu.memref_slice %arg8[%c0_i32_91, %c0_i32_92] : memref<2x2x!tpu.dma_semaphore, #tpu.memory_space<semaphore_mem>> -> memref<1x1x!tpu.dma_semaphore, #tpu.memory_space<semaphore_mem>>
      %144 = tpu.memref_squeeze %143 : memref<1x1x!tpu.dma_semaphore, #tpu.memory_space<semaphore_mem>> -> memref<!tpu.dma_semaphore, #tpu.memory_space<semaphore_mem>>
      tpu.enqueue_dma source(%140 : memref<1x128xf32, #tpu.memory_space<vmem>>) target(%142 : memref<1x128xf32, #tpu.memory_space<vmem>>) target_semaphore(%144 : memref<!tpu.dma_semaphore, #tpu.memory_space<semaphore_mem>>)
      %c0_i32_95 = arith.constant 0 : i32
      %c0_i32_96 = arith.constant 0 : i32
      %c1_i32_97 = arith.constant 1 : i32
      %c0_i32_98 = arith.constant 0 : i32
      %145 = tpu.memref_slice %arg4[%139, %c0_i32_98] : memref<64x128xf32, #tpu.memory_space<vmem>> -> memref<1x128xf32, #tpu.memory_space<vmem>>
      %c0_i32_99 = arith.constant 0 : i32
      %146 = tpu.memref_slice %arg7[%c0_i32_95, %133, %c0_i32_99] : memref<2x128x128xf32, #tpu.memory_space<vmem>> -> memref<1x1x128xf32, #tpu.memory_space<vmem>>
      %147 = tpu.memref_squeeze %146 : memref<1x1x128xf32, #tpu.memory_space<vmem>> -> memref<1x128xf32, #tpu.memory_space<vmem>>
      %148 = tpu.memref_slice %arg8[%c0_i32_96, %c1_i32_97] : memref<2x2x!tpu.dma_semaphore, #tpu.memory_space<semaphore_mem>> -> memref<1x1x!tpu.dma_semaphore, #tpu.memory_space<semaphore_mem>>
      %149 = tpu.memref_squeeze %148 : memref<1x1x!tpu.dma_semaphore, #tpu.memory_space<semaphore_mem>> -> memref<!tpu.dma_semaphore, #tpu.memory_space<semaphore_mem>>
      tpu.enqueue_dma source(%145 : memref<1x128xf32, #tpu.memory_space<vmem>>) target(%147 : memref<1x128xf32, #tpu.memory_space<vmem>>) target_semaphore(%149 : memref<!tpu.dma_semaphore, #tpu.memory_space<semaphore_mem>>)
      %c7_i32 = arith.constant 7 : i32
      %150 = arith.addi %30, %c7_i32 : i32
      %151 = arith.addi %1, %150 : i32
      %152 = arith.index_cast %151 : i32 to index
      %153 = memref.load %arg1[%152] : memref<128xi32, #tpu.memory_space<smem>>
      %154 = arith.addi %1, %150 : i32
      %155 = arith.index_cast %154 : i32 to index
      %156 = memref.load %arg2[%155] : memref<128xi32, #tpu.memory_space<smem>>
      %c0_i32_100 = arith.constant 0 : i32
      %c0_i32_101 = arith.constant 0 : i32
      %c0_i32_102 = arith.constant 0 : i32
      %c0_i32_103 = arith.constant 0 : i32
      %157 = tpu.memref_slice %arg3[%153, %c0_i32_103] : memref<64x128xf32, #tpu.memory_space<vmem>> -> memref<1x128xf32, #tpu.memory_space<vmem>>
      %c0_i32_104 = arith.constant 0 : i32
      %158 = tpu.memref_slice %arg6[%c0_i32_100, %150, %c0_i32_104] : memref<2x128x128xf32, #tpu.memory_space<vmem>> -> memref<1x1x128xf32, #tpu.memory_space<vmem>>
      %159 = tpu.memref_squeeze %158 : memref<1x1x128xf32, #tpu.memory_space<vmem>> -> memref<1x128xf32, #tpu.memory_space<vmem>>
      %160 = tpu.memref_slice %arg8[%c0_i32_101, %c0_i32_102] : memref<2x2x!tpu.dma_semaphore, #tpu.memory_space<semaphore_mem>> -> memref<1x1x!tpu.dma_semaphore, #tpu.memory_space<semaphore_mem>>
      %161 = tpu.memref_squeeze %160 : memref<1x1x!tpu.dma_semaphore, #tpu.memory_space<semaphore_mem>> -> memref<!tpu.dma_semaphore, #tpu.memory_space<semaphore_mem>>
      tpu.enqueue_dma source(%157 : memref<1x128xf32, #tpu.memory_space<vmem>>) target(%159 : memref<1x128xf32, #tpu.memory_space<vmem>>) target_semaphore(%161 : memref<!tpu.dma_semaphore, #tpu.memory_space<semaphore_mem>>)
      %c0_i32_105 = arith.constant 0 : i32
      %c0_i32_106 = arith.constant 0 : i32
      %c1_i32_107 = arith.constant 1 : i32
      %c0_i32_108 = arith.constant 0 : i32
      %162 = tpu.memref_slice %arg4[%156, %c0_i32_108] : memref<64x128xf32, #tpu.memory_space<vmem>> -> memref<1x128xf32, #tpu.memory_space<vmem>>
      %c0_i32_109 = arith.constant 0 : i32
      %163 = tpu.memref_slice %arg7[%c0_i32_105, %150, %c0_i32_109] : memref<2x128x128xf32, #tpu.memory_space<vmem>> -> memref<1x1x128xf32, #tpu.memory_space<vmem>>
      %164 = tpu.memref_squeeze %163 : memref<1x1x128xf32, #tpu.memory_space<vmem>> -> memref<1x128xf32, #tpu.memory_space<vmem>>
      %165 = tpu.memref_slice %arg8[%c0_i32_106, %c1_i32_107] : memref<2x2x!tpu.dma_semaphore, #tpu.memory_space<semaphore_mem>> -> memref<1x1x!tpu.dma_semaphore, #tpu.memory_space<semaphore_mem>>
      %166 = tpu.memref_squeeze %165 : memref<1x1x!tpu.dma_semaphore, #tpu.memory_space<semaphore_mem>> -> memref<!tpu.dma_semaphore, #tpu.memory_space<semaphore_mem>>
      tpu.enqueue_dma source(%162 : memref<1x128xf32, #tpu.memory_space<vmem>>) target(%164 : memref<1x128xf32, #tpu.memory_space<vmem>>) target_semaphore(%166 : memref<!tpu.dma_semaphore, #tpu.memory_space<semaphore_mem>>)
    }
    %c16_i32_1 = arith.constant 16 : i32
    %c0_i32_2 = arith.constant 0 : i32
    %c0_i32_3 = arith.constant 0 : i32
    %c0_i32_4 = arith.constant 0 : i32
    %c0_i32_5 = arith.constant 0 : i32
    %c0_i32_6 = arith.constant 0 : i32
    %c0_i32_7 = arith.constant 0 : i32
    %3 = tpu.memref_slice %arg6[%c0_i32_2, %c0_i32_6, %c0_i32_7] : memref<2x128x128xf32, #tpu.memory_space<vmem>> -> memref<1x128x128xf32, #tpu.memory_space<vmem>>
    %4 = tpu.memref_squeeze %3 : memref<1x128x128xf32, #tpu.memory_space<vmem>> -> memref<128x128xf32, #tpu.memory_space<vmem>>
    %c0_i32_8 = arith.constant 0 : i32
    %c0_i32_9 = arith.constant 0 : i32
    %5 = tpu.memref_slice %arg6[%c0_i32_3, %c0_i32_8, %c0_i32_9] : memref<2x128x128xf32, #tpu.memory_space<vmem>> -> memref<1x128x128xf32, #tpu.memory_space<vmem>>
    %6 = tpu.memref_squeeze %5 : memref<1x128x128xf32, #tpu.memory_space<vmem>> -> memref<128x128xf32, #tpu.memory_space<vmem>>
    %7 = tpu.memref_slice %arg8[%c0_i32_4, %c0_i32_5] : memref<2x2x!tpu.dma_semaphore, #tpu.memory_space<semaphore_mem>> -> memref<1x1x!tpu.dma_semaphore, #tpu.memory_space<semaphore_mem>>
    %8 = tpu.memref_squeeze %7 : memref<1x1x!tpu.dma_semaphore, #tpu.memory_space<semaphore_mem>> -> memref<!tpu.dma_semaphore, #tpu.memory_space<semaphore_mem>>
    tpu.wait_dma2 semaphore(%8 : memref<!tpu.dma_semaphore, #tpu.memory_space<semaphore_mem>>) src(%4 : memref<128x128xf32, #tpu.memory_space<vmem>>) dst(%6 : memref<128x128xf32, #tpu.memory_space<vmem>>)
    %c0_i32_10 = arith.constant 0 : i32
    %c0_i32_11 = arith.constant 0 : i32
    %c0_i32_12 = arith.constant 0 : i32
    %c1_i32_13 = arith.constant 1 : i32
    %c0_i32_14 = arith.constant 0 : i32
    %c0_i32_15 = arith.constant 0 : i32
    %9 = tpu.memref_slice %arg7[%c0_i32_10, %c0_i32_14, %c0_i32_15] : memref<2x128x128xf32, #tpu.memory_space<vmem>> -> memref<1x128x128xf32, #tpu.memory_space<vmem>>
    %10 = tpu.memref_squeeze %9 : memref<1x128x128xf32, #tpu.memory_space<vmem>> -> memref<128x128xf32, #tpu.memory_space<vmem>>
    %c0_i32_16 = arith.constant 0 : i32
    %c0_i32_17 = arith.constant 0 : i32
    %11 = tpu.memref_slice %arg7[%c0_i32_11, %c0_i32_16, %c0_i32_17] : memref<2x128x128xf32, #tpu.memory_space<vmem>> -> memref<1x128x128xf32, #tpu.memory_space<vmem>>
    %12 = tpu.memref_squeeze %11 : memref<1x128x128xf32, #tpu.memory_space<vmem>> -> memref<128x128xf32, #tpu.memory_space<vmem>>
    %13 = tpu.memref_slice %arg8[%c0_i32_12, %c1_i32_13] : memref<2x2x!tpu.dma_semaphore, #tpu.memory_space<semaphore_mem>> -> memref<1x1x!tpu.dma_semaphore, #tpu.memory_space<semaphore_mem>>
    %14 = tpu.memref_squeeze %13 : memref<1x1x!tpu.dma_semaphore, #tpu.memory_space<semaphore_mem>> -> memref<!tpu.dma_semaphore, #tpu.memory_space<semaphore_mem>>
    tpu.wait_dma2 semaphore(%14 : memref<!tpu.dma_semaphore, #tpu.memory_space<semaphore_mem>>) src(%10 : memref<128x128xf32, #tpu.memory_space<vmem>>) dst(%12 : memref<128x128xf32, #tpu.memory_space<vmem>>)
    %c0 = arith.constant 0 : index
    %c0_18 = arith.constant 0 : index
    %c0_19 = arith.constant 0 : index
    %15 = vector.load %arg6[%c0, %c0_18, %c0_19] : memref<2x128x128xf32, #tpu.memory_space<vmem>>, vector<1x128x128xf32>
    %16 = vector.shape_cast %15 : vector<1x128x128xf32> to vector<128x128xf32>
    %c0_20 = arith.constant 0 : index
    %c0_21 = arith.constant 0 : index
    %c0_22 = arith.constant 0 : index
    %17 = vector.load %arg7[%c0_20, %c0_21, %c0_22] : memref<2x128x128xf32, #tpu.memory_space<vmem>>, vector<1x128x128xf32>
    %18 = vector.shape_cast %17 : vector<1x128x128xf32> to vector<128x128xf32>
    %19 = arith.mulf %16, %18 : vector<128x128xf32>
    %cst = arith.constant dense<0.000000e+00> : vector<128xf32>
    %20 = vector.multi_reduction <add>, %19, %cst [1] : vector<128x128xf32> to vector<128xf32>
    %21 = arith.negf %20 : vector<128xf32>
    %22 = math.exp %21 : vector<128xf32>
    %cst_23 = arith.constant 1.000000e+00 : f32
    %23 = vector.broadcast %cst_23 : f32 to vector<128xf32>
    %24 = arith.addf %23, %22 : vector<128xf32>
    %25 = arith.divf %23, %24 : vector<128xf32>
    %26 = vector.shape_cast %25 : vector<128xf32> to vector<1x128xf32>
    %c0_24 = arith.constant 0 : index
    %c0_25 = arith.constant 0 : index
    %27 = vector.load %arg5[%c0_24, %c0_25] : memref<1x128xf32, #tpu.memory_space<vmem>>, vector<1x128xf32>
    tpu.vector_store %arg5[%c0_24, %c0_25], %26 {strides = array<i32>} : memref<1x128xf32, #tpu.memory_space<vmem>>, vector<1x128xf32>,
    return
  }
  func.func @transform_0(%arg0: i32, %arg1: memref<128xi32, #tpu.memory_space<smem>>, %arg2: memref<128xi32, #tpu.memory_space<smem>>) -> (i32, i32) {
    %c0_i32 = arith.constant 0 : i32
    %c0_i32_0 = arith.constant 0 : i32
    %c0_i32_1 = arith.constant 0 : i32
    return %c0_i32, %c0_i32_0 : i32, i32
  }
  func.func @transform_1(%arg0: i32, %arg1: memref<128xi32, #tpu.memory_space<smem>>, %arg2: memref<128xi32, #tpu.memory_space<smem>>) -> (i32, i32) {
    %c0_i32 = arith.constant 0 : i32
    %c0_i32_0 = arith.constant 0 : i32
    %c0_i32_1 = arith.constant 0 : i32
    return %c0_i32, %c0_i32_0 : i32, i32
  }
  func.func @transform_2(%arg0: i32, %arg1: memref<128xi32, #tpu.memory_space<smem>>, %arg2: memref<128xi32, #tpu.memory_space<smem>>) -> (i32, i32) {
    %c0_i32 = arith.constant 0 : i32
    %c0_i32_0 = arith.constant 0 : i32
    return %c0_i32, %arg0 : i32, i32
  }
}

</mosaic_0001>

<llo_original>
// kernel: mf_forward.1
$region0: #{mf_forward.1}
  #allocation0 [shape = 'u32[]', space=smem, size = 0x4, offset = 0x4, fixed_abs, tag = 'smem constant byte address 0x4 - core index']
  #allocation1 [shape = 'u32[72,128]{1,0:T(1,128)}', space=vmem, size = 0x9000, scoped, tag = 'internal scratch']
  #allocation2 [shape = 'f32[2,128,128]{2,1,0:T(8,128)}', space=vmem, size = 0x20000, scoped, tag = 'scratch operand']
  #allocation3 [shape = 'f32[2,128,128]{2,1,0:T(8,128)}', space=vmem, size = 0x20000, scoped, tag = 'scratch operand']
  #allocation4 [shape = 's32[4]{0}', space=sflag, size = 0x10, scoped, tag = 'scratch operand']
  #allocation5 [shape = 's32[1]{0}', space=sflag, size = 0x4, scoped, tag = 'scoped memory for mf_forward.1']
  #allocation6 [shape = 'u8[512]{0}', space=smem, size = 0x200, scoped, tag = 'prefetched SMEM operand 0']
  #allocation7 [shape = 'u8[512]{0}', space=smem, size = 0x200, scoped, tag = 'prefetched SMEM operand 1']
  #allocation12 [shape = 's32[]', space=sflag, size = 0x4, offset = 0, fixed_abs, tag = 'sflag constant byte address 0x0 - dummy sync flag']
  #allocation13 [shape = 's32[]', space=sflag, size = 0x4, offset = 0, fixed_abs, tag = 'sflag constant byte address 0x0 - dummy sync flag']
  #allocation14 [shape = 's32[]', space=sflag, size = 0x4, offset = 0, fixed_abs, tag = 'sflag constant byte address 0x0 - dummy sync flag']
  #allocation15 [shape = 's32[]', space=sflag, size = 0x4, offset = 0, fixed_abs, tag = 'sflag constant byte address 0x0 - dummy sync flag']
  #allocation16 [shape = 's32[]', space=sflag, size = 0x4, offset = 0, fixed_abs, tag = 'sflag constant byte address 0x0 - dummy sync flag']
  #allocation17 [shape = 's32[]', space=sflag, size = 0x4, offset = 0, fixed_abs, tag = 'sflag constant byte address 0x0 - dummy sync flag']
  #allocation18 [shape = 's32[]', space=sflag, size = 0x4, offset = 0, fixed_abs, tag = 'sflag constant byte address 0x0 - dummy sync flag']
  #allocation19 [shape = 's32[]', space=sflag, size = 0x4, offset = 0, fixed_abs, tag = 'sflag constant byte address 0x0 - dummy sync flag']
  #allocation20 [shape = 's32[]', space=sflag, size = 0x4, offset = 0, fixed_abs, tag = 'sflag constant byte address 0x0 - dummy sync flag']
  #allocation21 [shape = 's32[]', space=sflag, size = 0x4, offset = 0, fixed_abs, tag = 'sflag constant byte address 0x0 - dummy sync flag']
  #allocation22 [shape = 's32[]', space=sflag, size = 0x4, offset = 0, fixed_abs, tag = 'sflag constant byte address 0x0 - dummy sync flag']
  #allocation23 [shape = 's32[]', space=sflag, size = 0x4, offset = 0, fixed_abs, tag = 'sflag constant byte address 0x0 - dummy sync flag']
  #allocation24 [shape = 's32[]', space=sflag, size = 0x4, offset = 0, fixed_abs, tag = 'sflag constant byte address 0x0 - dummy sync flag']
  #allocation25 [shape = 's32[]', space=sflag, size = 0x4, offset = 0, fixed_abs, tag = 'sflag constant byte address 0x0 - dummy sync flag']
  #allocation26 [shape = 's32[]', space=sflag, size = 0x4, offset = 0, fixed_abs, tag = 'sflag constant byte address 0x0 - dummy sync flag']
  #allocation27 [shape = 's32[]', space=sflag, size = 0x4, offset = 0, fixed_abs, tag = 'sflag constant byte address 0x0 - dummy sync flag']
  %s0 = inlined_call_operand.vmem [shape: s32[128], index: 0, kind: input, shape index: {}]
  %s1 = inlined_call_operand.vmem [shape: s32[128], index: 1, kind: input, shape index: {}]
  %s2 = inlined_call_operand.hbm [shape: f32[64,128], index: 2, kind: input, shape index: {}]
  %s3 = inlined_call_operand.hbm [shape: f32[64,128], index: 3, kind: input, shape index: {}]
  %s4 = inlined_call_operand.vmem [shape: f32[1,128], index: 4, kind: output, shape index: {}]
  %s5 = sld [smem:[#allocation0]]
  $region513: #{mf_forward.1} parent=0
    _
  %s7 = ssub.s32 1, %s5
  %s8 = scalar_select 0, %s7, %s5
  %s10 = sshll.u32 %s0, 4
  %s11 = int_to_ptr.vmem [resolvable:$true] %s10
  %13 = dma.vmem_to_smem %s11, 16, [#allocation6], [#allocation5]
  %s15 = sshll.u32 %s1, 4
  %s16 = int_to_ptr.vmem [resolvable:$true] %s15
  %18 = dma.vmem_to_smem %s16, 16, [#allocation7], [#allocation5]
  %20 = dma.done [#allocation5], 32
  %21 = sfence
  $region1: #{mf_forward.1} parent=0
    #allocation8 [shape = 'u8[32768]{0}', space=vmem, size = 0x8000, scoped, tag = 'input window, operand 2, single buffered']
    #allocation9 [shape = 's32[1]{0}', space=sflag, size = 0x4, scoped, tag = 'scoped memory for mf_forward.1']
    #allocation10 [shape = 'u8[32768]{0}', space=vmem, size = 0x8000, scoped, tag = 'input window, operand 3, single buffered']
    #allocation11 [shape = 's32[1]{0}', space=sflag, size = 0x4, scoped, tag = 'scoped memory for mf_forward.1']
    %22 = vsyncpa [#allocation9], 0
    %23 = vsyncpa [#allocation11], 0
    // Predicated region
    $region2: #{mf_forward.1} parent=1 // pred_check
      _
    $region3: #{mf_forward.1} parent=1 // pred_check_branch
      %25 = sbr.rel (0) target = $region5
    $region4: #{mf_forward.1} parent=1 // pred_region
      %27 = vsyncadd [#allocation9], 0
      %s28 = sshll.u32 %s2, 4
      %s29 = int_to_ptr.hbm [resolvable:$true] %s28
      %s30 = sshll.u32 [#allocation8], 4
      %s31 = int_to_ptr.vmem [resolvable:$true] %s30
      %36 = dma.hbm_to_vmem [thread:$0]  %s29, 1024, %s31, [#allocation9], 128, 128, 8
    $region5: #{mf_forward.1} parent=1 // pred_fallthru
      _
    // Predicated region
    $region6: #{mf_forward.1} parent=1 // pred_check
      _
    $region7: #{mf_forward.1} parent=1 // pred_check_branch
      %38 = sbr.rel (0) target = $region9
    $region8: #{mf_forward.1} parent=1 // pred_region
      %40 = vsyncadd [#allocation11], 0
      %s41 = sshll.u32 %s3, 4
      %s42 = int_to_ptr.hbm [resolvable:$true] %s41
      %s43 = sshll.u32 [#allocation10], 4
      %s44 = int_to_ptr.vmem [resolvable:$true] %s43
      %49 = dma.hbm_to_vmem [thread:$0]  %s42, 1024, %s44, [#allocation11], 128, 128, 8
    $region9: #{mf_forward.1} parent=1 // pred_fallthru
      _
    // Predicated region
    $region10: #{mf_forward.1} parent=1 // pred_check
      _
    $region11: #{mf_forward.1} parent=1 // pred_check_branch
      %51 = sbr.rel (0) target = $region13
    $region12: #{mf_forward.1} parent=1 // pred_region
      %53 = dma.done [#allocation9], 1024
    $region13: #{mf_forward.1} parent=1 // pred_fallthru
      _
    // Predicated region
    $region14: #{mf_forward.1} parent=1 // pred_check
      _
    $region15: #{mf_forward.1} parent=1 // pred_check_branch
      %55 = sbr.rel (0) target = $region17
    $region16: #{mf_forward.1} parent=1 // pred_region
      %57 = dma.done [#allocation11], 1024
    $region17: #{mf_forward.1} parent=1 // pred_fallthru
      _
    %s58 = smul.u32 0, 128
    loop: start=0, step=1, limit=16
    $region18: #{mf_forward.1} parent=1 // loop_pre_header
      _
    $region19: #{mf_forward.1} parent=1 // loop_header
      %s60 = sphi 0, %s64
      %p61 = scmp.ge.s32.totalorder %s60, 16
    $region20: #{mf_forward.1} parent=1 // loop_header_branch
      %63 = sbr.rel (%p61) target = $region24
    $region21: #{mf_forward.1} parent=1 // loop_body
      %s65 = smul.u32 %s60, 8
      %s66 = sadd.s32 %s58, %s65
      %s67 = sld [smem:[#allocation6 + %s66]]
      %s68 = sld [smem:[#allocation7 + %s66]]
      %s69 = scalar_lea.vmem [#allocation8], %s67
      %s70 = scalar_lea.vmem [#allocation2], %s65
      // Predicated region
      $region25: #{mf_forward.1} parent=21 // pred_check
        _
      $region26: #{mf_forward.1} parent=21 // pred_check_branch
        %72 = sbr.rel target = $region28
      $region27: #{mf_forward.1} parent=21 // pred_region
        // Predicated region
        $region40: #{mf_forward.1} parent=27 // pred_check
          _
        $region41: #{mf_forward.1} parent=27 // pred_check_branch
          %88 = sbr.rel (0) target = $region43
        $region42: #{mf_forward.1} parent=27 // pred_region
          %s90 = ssub.s32 2, 1
          loop: start=0, step=1, limit=1
          $region44: #{mf_forward.1} parent=42 // loop_pre_header
            _
          $region45: #{mf_forward.1} parent=42 // loop_header
            %s92 = sphi 0, %s96
            %p93 = scmp.ge.s32.totalorder %s92, 1
            %s97 = sphi %s69, %s69
            %s98 = sphi %s70, %s70
          $region46: #{mf_forward.1} parent=42 // loop_header_branch
            %95 = sbr.rel (%p93) target = $region50
          $region47: #{mf_forward.1} parent=42 // loop_body
            %v99 = vld [vmem:[%s97] sm:%s90]
            %100 = vst [vmem:[%s98] sm:%s90] %v99
          $region48: #{mf_forward.1} parent=42 // loop_footer
            %s96 = sadd.s32 1, %s92
          $region49: #{mf_forward.1} parent=42 // loop_footer_branch
            %91 = sbr.rel target = $region45
          $region50: #{mf_forward.1} parent=42 // loop_exit
            _
        $region43: #{mf_forward.1} parent=27 // pred_fallthru
          _
      $region28: #{mf_forward.1} parent=21 // pred_fallthru
        _
      // Predicated region
      $region29: #{mf_forward.1} parent=21 // pred_check
        _
      $region30: #{mf_forward.1} parent=21 // pred_check_branch
        %74 = sbr.rel (0) target = $region32
      $region31: #{mf_forward.1} parent=21 // pred_region
        %s76 = ssub.s32 2, 1
        loop: start=0, step=1, limit=1
        $region33: #{mf_forward.1} parent=31 // loop_pre_header
          _
        $region34: #{mf_forward.1} parent=31 // loop_header
          %s78 = sphi 0, %s82
          %p79 = scmp.ge.s32.totalorder %s78, 1
          %s83 = sphi %s69, %s69
          %s84 = sphi %s70, %s70
        $region35: #{mf_forward.1} parent=31 // loop_header_branch
          %81 = sbr.rel (%p79) target = $region39
        $region36: #{mf_forward.1} parent=31 // loop_body
          %v85 = vld [vmem:[%s83] sm:%s76]
          %86 = vst [vmem:[%s84] sm:%s76] %v85
        $region37: #{mf_forward.1} parent=31 // loop_footer
          %s82 = sadd.s32 1, %s78
        $region38: #{mf_forward.1} parent=31 // loop_footer_branch
          %77 = sbr.rel target = $region34
        $region39: #{mf_forward.1} parent=31 // loop_exit
          _
      $region32: #{mf_forward.1} parent=21 // pred_fallthru
        _
      // Predicated region
      $region51: #{mf_forward.1} parent=21 // pred_check
        _
      $region52: #{mf_forward.1} parent=21 // pred_check_branch
        %103 = sbr.rel (0) target = $region54
      $region53: #{mf_forward.1} parent=21 // pred_region
        %104 = vsyncadd [#allocation4], 16
      $region54: #{mf_forward.1} parent=21 // pred_fallthru
        _
      %s105 = scalar_lea.vmem [#allocation10], %s68
      %s106 = scalar_lea.vmem [#allocation3], %s65
      %s107 = scalar_lea.sflag [#allocation4], 1
      // Predicated region
      $region55: #{mf_forward.1} parent=21 // pred_check
        _
      $region56: #{mf_forward.1} parent=21 // pred_check_branch
        %109 = sbr.rel target = $region58
      $region57: #{mf_forward.1} parent=21 // pred_region
        // Predicated region
        $region70: #{mf_forward.1} parent=57 // pred_check
          _
        $region71: #{mf_forward.1} parent=57 // pred_check_branch
          %125 = sbr.rel (0) target = $region73
        $region72: #{mf_forward.1} parent=57 // pred_region
          %s127 = ssub.s32 2, 1
          loop: start=0, step=1, limit=1
          $region74: #{mf_forward.1} parent=72 // loop_pre_header
            _
          $region75: #{mf_forward.1} parent=72 // loop_header
            %s129 = sphi 0, %s133
            %p130 = scmp.ge.s32.totalorder %s129, 1
            %s134 = sphi %s105, %s105
            %s135 = sphi %s106, %s106
          $region76: #{mf_forward.1} parent=72 // loop_header_branch
            %132 = sbr.rel (%p130) target = $region80
          $region77: #{mf_forward.1} parent=72 // loop_body
            %v136 = vld [vmem:[%s134] sm:%s127]
            %137 = vst [vmem:[%s135] sm:%s127] %v136
          $region78: #{mf_forward.1} parent=72 // loop_footer
            %s133 = sadd.s32 1, %s129
          $region79: #{mf_forward.1} parent=72 // loop_footer_branch
            %128 = sbr.rel target = $region75
          $region80: #{mf_forward.1} parent=72 // loop_exit
            _
        $region73: #{mf_forward.1} parent=57 // pred_fallthru
          _
      $region58: #{mf_forward.1} parent=21 // pred_fallthru
        _
      // Predicated region
      $region59: #{mf_forward.1} parent=21 // pred_check
        _
      $region60: #{mf_forward.1} parent=21 // pred_check_branch
        %111 = sbr.rel (0) target = $region62
      $region61: #{mf_forward.1} parent=21 // pred_region
        %s113 = ssub.s32 2, 1
        loop: start=0, step=1, limit=1
        $region63: #{mf_forward.1} parent=61 // loop_pre_header
          _
        $region64: #{mf_forward.1} parent=61 // loop_header
          %s115 = sphi 0, %s119
          %p116 = scmp.ge.s32.totalorder %s115, 1
          %s120 = sphi %s105, %s105
          %s121 = sphi %s106, %s106
        $region65: #{mf_forward.1} parent=61 // loop_header_branch
          %118 = sbr.rel (%p116) target = $region69
        $region66: #{mf_forward.1} parent=61 // loop_body
          %v122 = vld [vmem:[%s120] sm:%s113]
          %123 = vst [vmem:[%s121] sm:%s113] %v122
        $region67: #{mf_forward.1} parent=61 // loop_footer
          %s119 = sadd.s32 1, %s115
        $region68: #{mf_forward.1} parent=61 // loop_footer_branch
          %114 = sbr.rel target = $region64
        $region69: #{mf_forward.1} parent=61 // loop_exit
          _
      $region62: #{mf_forward.1} parent=21 // pred_fallthru
        _
      // Predicated region
      $region81: #{mf_forward.1} parent=21 // pred_check
        _
      $region82: #{mf_forward.1} parent=21 // pred_check_branch
        %140 = sbr.rel (0) target = $region84
      $region83: #{mf_forward.1} parent=21 // pred_region
        %141 = vsyncadd %s107, 16
      $region84: #{mf_forward.1} parent=21 // pred_fallthru
        _
      %s142 = sadd.s32 %s65, 1
      %s143 = sadd.s32 %s58, %s142
      %s144 = sld [smem:[#allocation6 + %s143]]
      %s145 = sld [smem:[#allocation7 + %s143]]
      %s146 = scalar_lea.vmem [#allocation8], %s144
      %s147 = scalar_lea.vmem [#allocation2], %s142
      // Predicated region
      $region85: #{mf_forward.1} parent=21 // pred_check
        _
      $region86: #{mf_forward.1} parent=21 // pred_check_branch
        %149 = sbr.rel target = $region88
      $region87: #{mf_forward.1} parent=21 // pred_region
        // Predicated region
        $region100: #{mf_forward.1} parent=87 // pred_check
          _
        $region101: #{mf_forward.1} parent=87 // pred_check_branch
          %165 = sbr.rel (0) target = $region103
        $region102: #{mf_forward.1} parent=87 // pred_region
          %s167 = ssub.s32 2, 1
          loop: start=0, step=1, limit=1
          $region104: #{mf_forward.1} parent=102 // loop_pre_header
            _
          $region105: #{mf_forward.1} parent=102 // loop_header
            %s169 = sphi 0, %s173
            %p170 = scmp.ge.s32.totalorder %s169, 1
            %s174 = sphi %s146, %s146
            %s175 = sphi %s147, %s147
          $region106: #{mf_forward.1} parent=102 // loop_header_branch
            %172 = sbr.rel (%p170) target = $region110
          $region107: #{mf_forward.1} parent=102 // loop_body
            %v176 = vld [vmem:[%s174] sm:%s167]
            %177 = vst [vmem:[%s175] sm:%s167] %v176
          $region108: #{mf_forward.1} parent=102 // loop_footer
            %s173 = sadd.s32 1, %s169
          $region109: #{mf_forward.1} parent=102 // loop_footer_branch
            %168 = sbr.rel target = $region105
          $region110: #{mf_forward.1} parent=102 // loop_exit
            _
        $region103: #{mf_forward.1} parent=87 // pred_fallthru
          _
      $region88: #{mf_forward.1} parent=21 // pred_fallthru
        _
      // Predicated region
      $region89: #{mf_forward.1} parent=21 // pred_check
        _
      $region90: #{mf_forward.1} parent=21 // pred_check_branch
        %151 = sbr.rel (0) target = $region92
      $region91: #{mf_forward.1} parent=21 // pred_region
        %s153 = ssub.s32 2, 1
        loop: start=0, step=1, limit=1
        $region93: #{mf_forward.1} parent=91 // loop_pre_header
          _
        $region94: #{mf_forward.1} parent=91 // loop_header
          %s155 = sphi 0, %s159
          %p156 = scmp.ge.s32.totalorder %s155, 1
          %s160 = sphi %s146, %s146
          %s161 = sphi %s147, %s147
        $region95: #{mf_forward.1} parent=91 // loop_header_branch
          %158 = sbr.rel (%p156) target = $region99
        $region96: #{mf_forward.1} parent=91 // loop_body
          %v162 = vld [vmem:[%s160] sm:%s153]
          %163 = vst [vmem:[%s161] sm:%s153] %v162
        $region97: #{mf_forward.1} parent=91 // loop_footer
          %s159 = sadd.s32 1, %s155
        $region98: #{mf_forward.1} parent=91 // loop_footer_branch
          %154 = sbr.rel target = $region94
        $region99: #{mf_forward.1} parent=91 // loop_exit
          _
      $region92: #{mf_forward.1} parent=21 // pred_fallthru
        _
      // Predicated region
      $region111: #{mf_forward.1} parent=21 // pred_check
        _
      $region112: #{mf_forward.1} parent=21 // pred_check_branch
        %180 = sbr.rel (0) target = $region114
      $region113: #{mf_forward.1} parent=21 // pred_region
        %181 = vsyncadd [#allocation4], 16
      $region114: #{mf_forward.1} parent=21 // pred_fallthru
        _
      %s182 = scalar_lea.vmem [#allocation10], %s145
      %s183 = scalar_lea.vmem [#allocation3], %s142
      // Predicated region
      $region115: #{mf_forward.1} parent=21 // pred_check
        _
      $region116: #{mf_forward.1} parent=21 // pred_check_branch
        %185 = sbr.rel target = $region118
      $region117: #{mf_forward.1} parent=21 // pred_region
        // Predicated region
        $region130: #{mf_forward.1} parent=117 // pred_check
          _
        $region131: #{mf_forward.1} parent=117 // pred_check_branch
          %201 = sbr.rel (0) target = $region133
        $region132: #{mf_forward.1} parent=117 // pred_region
          %s203 = ssub.s32 2, 1
          loop: start=0, step=1, limit=1
          $region134: #{mf_forward.1} parent=132 // loop_pre_header
            _
          $region135: #{mf_forward.1} parent=132 // loop_header
            %s205 = sphi 0, %s209
            %p206 = scmp.ge.s32.totalorder %s205, 1
            %s210 = sphi %s182, %s182
            %s211 = sphi %s183, %s183
          $region136: #{mf_forward.1} parent=132 // loop_header_branch
            %208 = sbr.rel (%p206) target = $region140
          $region137: #{mf_forward.1} parent=132 // loop_body
            %v212 = vld [vmem:[%s210] sm:%s203]
            %213 = vst [vmem:[%s211] sm:%s203] %v212
          $region138: #{mf_forward.1} parent=132 // loop_footer
            %s209 = sadd.s32 1, %s205
          $region139: #{mf_forward.1} parent=132 // loop_footer_branch
            %204 = sbr.rel target = $region135
          $region140: #{mf_forward.1} parent=132 // loop_exit
            _
        $region133: #{mf_forward.1} parent=117 // pred_fallthru
          _
      $region118: #{mf_forward.1} parent=21 // pred_fallthru
        _
      // Predicated region
      $region119: #{mf_forward.1} parent=21 // pred_check
        _
      $region120: #{mf_forward.1} parent=21 // pred_check_branch
        %187 = sbr.rel (0) target = $region122
      $region121: #{mf_forward.1} parent=21 // pred_region
        %s189 = ssub.s32 2, 1
        loop: start=0, step=1, limit=1
        $region123: #{mf_forward.1} parent=121 // loop_pre_header
          _
        $region124: #{mf_forward.1} parent=121 // loop_header
          %s191 = sphi 0, %s195
          %p192 = scmp.ge.s32.totalorder %s191, 1
          %s196 = sphi %s182, %s182
          %s197 = sphi %s183, %s183
        $region125: #{mf_forward.1} parent=121 // loop_header_branch
          %194 = sbr.rel (%p192) target = $region129
        $region126: #{mf_forward.1} parent=121 // loop_body
          %v198 = vld [vmem:[%s196] sm:%s189]
          %199 = vst [vmem:[%s197] sm:%s189] %v198
        $region127: #{mf_forward.1} parent=121 // loop_footer
          %s195 = sadd.s32 1, %s191
        $region128: #{mf_forward.1} parent=121 // loop_footer_branch
          %190 = sbr.rel target = $region124
        $region129: #{mf_forward.1} parent=121 // loop_exit
          _
      $region122: #{mf_forward.1} parent=21 // pred_fallthru
        _
      // Predicated region
      $region141: #{mf_forward.1} parent=21 // pred_check
        _
      $region142: #{mf_forward.1} parent=21 // pred_check_branch
        %216 = sbr.rel (0) target = $region144
      $region143: #{mf_forward.1} parent=21 // pred_region
        %217 = vsyncadd %s107, 16
      $region144: #{mf_forward.1} parent=21 // pred_fallthru
        _
      %s218 = sadd.s32 %s65, 2
      %s219 = sadd.s32 %s58, %s218
      %s220 = sld [smem:[#allocation6 + %s219]]
      %s221 = sld [smem:[#allocation7 + %s219]]
      %s222 = scalar_lea.vmem [#allocation8], %s220
      %s223 = scalar_lea.vmem [#allocation2], %s218
      // Predicated region
      $region145: #{mf_forward.1} parent=21 // pred_check
        _
      $region146: #{mf_forward.1} parent=21 // pred_check_branch
        %225 = sbr.rel target = $region148
      $region147: #{mf_forward.1} parent=21 // pred_region
        // Predicated region
        $region160: #{mf_forward.1} parent=147 // pred_check
          _
        $region161: #{mf_forward.1} parent=147 // pred_check_branch
          %241 = sbr.rel (0) target = $region163
        $region162: #{mf_forward.1} parent=147 // pred_region
          %s243 = ssub.s32 2, 1
          loop: start=0, step=1, limit=1
          $region164: #{mf_forward.1} parent=162 // loop_pre_header
            _
          $region165: #{mf_forward.1} parent=162 // loop_header
            %s245 = sphi 0, %s249
            %p246 = scmp.ge.s32.totalorder %s245, 1
            %s250 = sphi %s222, %s222
            %s251 = sphi %s223, %s223
          $region166: #{mf_forward.1} parent=162 // loop_header_branch
            %248 = sbr.rel (%p246) target = $region170
          $region167: #{mf_forward.1} parent=162 // loop_body
            %v252 = vld [vmem:[%s250] sm:%s243]
            %253 = vst [vmem:[%s251] sm:%s243] %v252
          $region168: #{mf_forward.1} parent=162 // loop_footer
            %s249 = sadd.s32 1, %s245
          $region169: #{mf_forward.1} parent=162 // loop_footer_branch
            %244 = sbr.rel target = $region165
          $region170: #{mf_forward.1} parent=162 // loop_exit
            _
        $region163: #{mf_forward.1} parent=147 // pred_fallthru
          _
      $region148: #{mf_forward.1} parent=21 // pred_fallthru
        _
      // Predicated region
      $region149: #{mf_forward.1} parent=21 // pred_check
        _
      $region150: #{mf_forward.1} parent=21 // pred_check_branch
        %227 = sbr.rel (0) target = $region152
      $region151: #{mf_forward.1} parent=21 // pred_region
        %s229 = ssub.s32 2, 1
        loop: start=0, step=1, limit=1
        $region153: #{mf_forward.1} parent=151 // loop_pre_header
          _
        $region154: #{mf_forward.1} parent=151 // loop_header
          %s231 = sphi 0, %s235
          %p232 = scmp.ge.s32.totalorder %s231, 1
          %s236 = sphi %s222, %s222
          %s237 = sphi %s223, %s223
        $region155: #{mf_forward.1} parent=151 // loop_header_branch
          %234 = sbr.rel (%p232) target = $region159
        $region156: #{mf_forward.1} parent=151 // loop_body
          %v238 = vld [vmem:[%s236] sm:%s229]
          %239 = vst [vmem:[%s237] sm:%s229] %v238
        $region157: #{mf_forward.1} parent=151 // loop_footer
          %s235 = sadd.s32 1, %s231
        $region158: #{mf_forward.1} parent=151 // loop_footer_branch
          %230 = sbr.rel target = $region154
        $region159: #{mf_forward.1} parent=151 // loop_exit
          _
      $region152: #{mf_forward.1} parent=21 // pred_fallthru
        _
      // Predicated region
      $region171: #{mf_forward.1} parent=21 // pred_check
        _
      $region172: #{mf_forward.1} parent=21 // pred_check_branch
        %256 = sbr.rel (0) target = $region174
      $region173: #{mf_forward.1} parent=21 // pred_region
        %257 = vsyncadd [#allocation4], 16
      $region174: #{mf_forward.1} parent=21 // pred_fallthru
        _
      %s258 = scalar_lea.vmem [#allocation10], %s221
      %s259 = scalar_lea.vmem [#allocation3], %s218
      // Predicated region
      $region175: #{mf_forward.1} parent=21 // pred_check
        _
      $region176: #{mf_forward.1} parent=21 // pred_check_branch
        %261 = sbr.rel target = $region178
      $region177: #{mf_forward.1} parent=21 // pred_region
        // Predicated region
        $region190: #{mf_forward.1} parent=177 // pred_check
          _
        $region191: #{mf_forward.1} parent=177 // pred_check_branch
          %277 = sbr.rel (0) target = $region193
        $region192: #{mf_forward.1} parent=177 // pred_region
          %s279 = ssub.s32 2, 1
          loop: start=0, step=1, limit=1
          $region194: #{mf_forward.1} parent=192 // loop_pre_header
            _
          $region195: #{mf_forward.1} parent=192 // loop_header
            %s281 = sphi 0, %s285
            %p282 = scmp.ge.s32.totalorder %s281, 1
            %s286 = sphi %s258, %s258
            %s287 = sphi %s259, %s259
          $region196: #{mf_forward.1} parent=192 // loop_header_branch
            %284 = sbr.rel (%p282) target = $region200
          $region197: #{mf_forward.1} parent=192 // loop_body
            %v288 = vld [vmem:[%s286] sm:%s279]
            %289 = vst [vmem:[%s287] sm:%s279] %v288
          $region198: #{mf_forward.1} parent=192 // loop_footer
            %s285 = sadd.s32 1, %s281
          $region199: #{mf_forward.1} parent=192 // loop_footer_branch
            %280 = sbr.rel target = $region195
          $region200: #{mf_forward.1} parent=192 // loop_exit
            _
        $region193: #{mf_forward.1} parent=177 // pred_fallthru
          _
      $region178: #{mf_forward.1} parent=21 // pred_fallthru
        _
      // Predicated region
      $region179: #{mf_forward.1} parent=21 // pred_check
        _
      $region180: #{mf_forward.1} parent=21 // pred_check_branch
        %263 = sbr.rel (0) target = $region182
      $region181: #{mf_forward.1} parent=21 // pred_region
        %s265 = ssub.s32 2, 1
        loop: start=0, step=1, limit=1
        $region183: #{mf_forward.1} parent=181 // loop_pre_header
          _
        $region184: #{mf_forward.1} parent=181 // loop_header
          %s267 = sphi 0, %s271
          %p268 = scmp.ge.s32.totalorder %s267, 1
          %s272 = sphi %s258, %s258
          %s273 = sphi %s259, %s259
        $region185: #{mf_forward.1} parent=181 // loop_header_branch
          %270 = sbr.rel (%p268) target = $region189
        $region186: #{mf_forward.1} parent=181 // loop_body
          %v274 = vld [vmem:[%s272] sm:%s265]
          %275 = vst [vmem:[%s273] sm:%s265] %v274
        $region187: #{mf_forward.1} parent=181 // loop_footer
          %s271 = sadd.s32 1, %s267
        $region188: #{mf_forward.1} parent=181 // loop_footer_branch
          %266 = sbr.rel target = $region184
        $region189: #{mf_forward.1} parent=181 // loop_exit
          _
      $region182: #{mf_forward.1} parent=21 // pred_fallthru
        _
      // Predicated region
      $region201: #{mf_forward.1} parent=21 // pred_check
        _
      $region202: #{mf_forward.1} parent=21 // pred_check_branch
        %292 = sbr.rel (0) target = $region204
      $region203: #{mf_forward.1} parent=21 // pred_region
        %293 = vsyncadd %s107, 16
      $region204: #{mf_forward.1} parent=21 // pred_fallthru
        _
      %s294 = sadd.s32 %s65, 3
      %s295 = sadd.s32 %s58, %s294
      %s296 = sld [smem:[#allocation6 + %s295]]
      %s297 = sld [smem:[#allocation7 + %s295]]
      %s298 = scalar_lea.vmem [#allocation8], %s296
      %s299 = scalar_lea.vmem [#allocation2], %s294
      // Predicated region
      $region205: #{mf_forward.1} parent=21 // pred_check
        _
      $region206: #{mf_forward.1} parent=21 // pred_check_branch
        %301 = sbr.rel target = $region208
      $region207: #{mf_forward.1} parent=21 // pred_region
        // Predicated region
        $region220: #{mf_forward.1} parent=207 // pred_check
          _
        $region221: #{mf_forward.1} parent=207 // pred_check_branch
          %317 = sbr.rel (0) target = $region223
        $region222: #{mf_forward.1} parent=207 // pred_region
          %s319 = ssub.s32 2, 1
          loop: start=0, step=1, limit=1
          $region224: #{mf_forward.1} parent=222 // loop_pre_header
            _
          $region225: #{mf_forward.1} parent=222 // loop_header
            %s321 = sphi 0, %s325
            %p322 = scmp.ge.s32.totalorder %s321, 1
            %s326 = sphi %s298, %s298
            %s327 = sphi %s299, %s299
          $region226: #{mf_forward.1} parent=222 // loop_header_branch
            %324 = sbr.rel (%p322) target = $region230
          $region227: #{mf_forward.1} parent=222 // loop_body
            %v328 = vld [vmem:[%s326] sm:%s319]
            %329 = vst [vmem:[%s327] sm:%s319] %v328
          $region228: #{mf_forward.1} parent=222 // loop_footer
            %s325 = sadd.s32 1, %s321
          $region229: #{mf_forward.1} parent=222 // loop_footer_branch
            %320 = sbr.rel target = $region225
          $region230: #{mf_forward.1} parent=222 // loop_exit
            _
        $region223: #{mf_forward.1} parent=207 // pred_fallthru
          _
      $region208: #{mf_forward.1} parent=21 // pred_fallthru
        _
      // Predicated region
      $region209: #{mf_forward.1} parent=21 // pred_check
        _
      $region210: #{mf_forward.1} parent=21 // pred_check_branch
        %303 = sbr.rel (0) target = $region212
      $region211: #{mf_forward.1} parent=21 // pred_region
        %s305 = ssub.s32 2, 1
        loop: start=0, step=1, limit=1
        $region213: #{mf_forward.1} parent=211 // loop_pre_header
          _
        $region214: #{mf_forward.1} parent=211 // loop_header
          %s307 = sphi 0, %s311
          %p308 = scmp.ge.s32.totalorder %s307, 1
          %s312 = sphi %s298, %s298
          %s313 = sphi %s299, %s299
        $region215: #{mf_forward.1} parent=211 // loop_header_branch
          %310 = sbr.rel (%p308) target = $region219
        $region216: #{mf_forward.1} parent=211 // loop_body
          %v314 = vld [vmem:[%s312] sm:%s305]
          %315 = vst [vmem:[%s313] sm:%s305] %v314
        $region217: #{mf_forward.1} parent=211 // loop_footer
          %s311 = sadd.s32 1, %s307
        $region218: #{mf_forward.1} parent=211 // loop_footer_branch
          %306 = sbr.rel target = $region214
        $region219: #{mf_forward.1} parent=211 // loop_exit
          _
      $region212: #{mf_forward.1} parent=21 // pred_fallthru
        _
      // Predicated region
      $region231: #{mf_forward.1} parent=21 // pred_check
        _
      $region232: #{mf_forward.1} parent=21 // pred_check_branch
        %332 = sbr.rel (0) target = $region234
      $region233: #{mf_forward.1} parent=21 // pred_region
        %333 = vsyncadd [#allocation4], 16
      $region234: #{mf_forward.1} parent=21 // pred_fallthru
        _
      %s334 = scalar_lea.vmem [#allocation10], %s297
      %s335 = scalar_lea.vmem [#allocation3], %s294
      // Predicated region
      $region235: #{mf_forward.1} parent=21 // pred_check
        _
      $region236: #{mf_forward.1} parent=21 // pred_check_branch
        %337 = sbr.rel target = $region238
      $region237: #{mf_forward.1} parent=21 // pred_region
        // Predicated region
        $region250: #{mf_forward.1} parent=237 // pred_check
          _
        $region251: #{mf_forward.1} parent=237 // pred_check_branch
          %353 = sbr.rel (0) target = $region253
        $region252: #{mf_forward.1} parent=237 // pred_region
          %s355 = ssub.s32 2, 1
          loop: start=0, step=1, limit=1
          $region254: #{mf_forward.1} parent=252 // loop_pre_header
            _
          $region255: #{mf_forward.1} parent=252 // loop_header
            %s357 = sphi 0, %s361
            %p358 = scmp.ge.s32.totalorder %s357, 1
            %s362 = sphi %s334, %s334
            %s363 = sphi %s335, %s335
          $region256: #{mf_forward.1} parent=252 // loop_header_branch
            %360 = sbr.rel (%p358) target = $region260
          $region257: #{mf_forward.1} parent=252 // loop_body
            %v364 = vld [vmem:[%s362] sm:%s355]
            %365 = vst [vmem:[%s363] sm:%s355] %v364
          $region258: #{mf_forward.1} parent=252 // loop_footer
            %s361 = sadd.s32 1, %s357
          $region259: #{mf_forward.1} parent=252 // loop_footer_branch
            %356 = sbr.rel target = $region255
          $region260: #{mf_forward.1} parent=252 // loop_exit
            _
        $region253: #{mf_forward.1} parent=237 // pred_fallthru
          _
      $region238: #{mf_forward.1} parent=21 // pred_fallthru
        _
      // Predicated region
      $region239: #{mf_forward.1} parent=21 // pred_check
        _
      $region240: #{mf_forward.1} parent=21 // pred_check_branch
        %339 = sbr.rel (0) target = $region242
      $region241: #{mf_forward.1} parent=21 // pred_region
        %s341 = ssub.s32 2, 1
        loop: start=0, step=1, limit=1
        $region243: #{mf_forward.1} parent=241 // loop_pre_header
          _
        $region244: #{mf_forward.1} parent=241 // loop_header
          %s343 = sphi 0, %s347
          %p344 = scmp.ge.s32.totalorder %s343, 1
          %s348 = sphi %s334, %s334
          %s349 = sphi %s335, %s335
        $region245: #{mf_forward.1} parent=241 // loop_header_branch
          %346 = sbr.rel (%p344) target = $region249
        $region246: #{mf_forward.1} parent=241 // loop_body
          %v350 = vld [vmem:[%s348] sm:%s341]
          %351 = vst [vmem:[%s349] sm:%s341] %v350
        $region247: #{mf_forward.1} parent=241 // loop_footer
          %s347 = sadd.s32 1, %s343
        $region248: #{mf_forward.1} parent=241 // loop_footer_branch
          %342 = sbr.rel target = $region244
        $region249: #{mf_forward.1} parent=241 // loop_exit
          _
      $region242: #{mf_forward.1} parent=21 // pred_fallthru
        _
      // Predicated region
      $region261: #{mf_forward.1} parent=21 // pred_check
        _
      $region262: #{mf_forward.1} parent=21 // pred_check_branch
        %368 = sbr.rel (0) target = $region264
      $region263: #{mf_forward.1} parent=21 // pred_region
        %369 = vsyncadd %s107, 16
      $region264: #{mf_forward.1} parent=21 // pred_fallthru
        _
      %s370 = sadd.s32 %s65, 4
      %s371 = sadd.s32 %s58, %s370
      %s372 = sld [smem:[#allocation6 + %s371]]
      %s373 = sld [smem:[#allocation7 + %s371]]
      %s374 = scalar_lea.vmem [#allocation8], %s372
      %s375 = scalar_lea.vmem [#allocation2], %s370
      // Predicated region
      $region265: #{mf_forward.1} parent=21 // pred_check
        _
      $region266: #{mf_forward.1} parent=21 // pred_check_branch
        %377 = sbr.rel target = $region268
      $region267: #{mf_forward.1} parent=21 // pred_region
        // Predicated region
        $region280: #{mf_forward.1} parent=267 // pred_check
          _
        $region281: #{mf_forward.1} parent=267 // pred_check_branch
          %393 = sbr.rel (0) target = $region283
        $region282: #{mf_forward.1} parent=267 // pred_region
          %s395 = ssub.s32 2, 1
          loop: start=0, step=1, limit=1
          $region284: #{mf_forward.1} parent=282 // loop_pre_header
            _
          $region285: #{mf_forward.1} parent=282 // loop_header
            %s397 = sphi 0, %s401
            %p398 = scmp.ge.s32.totalorder %s397, 1
            %s402 = sphi %s374, %s374
            %s403 = sphi %s375, %s375
          $region286: #{mf_forward.1} parent=282 // loop_header_branch
            %400 = sbr.rel (%p398) target = $region290
          $region287: #{mf_forward.1} parent=282 // loop_body
            %v404 = vld [vmem:[%s402] sm:%s395]
            %405 = vst [vmem:[%s403] sm:%s395] %v404
          $region288: #{mf_forward.1} parent=282 // loop_footer
            %s401 = sadd.s32 1, %s397
          $region289: #{mf_forward.1} parent=282 // loop_footer_branch
            %396 = sbr.rel target = $region285
          $region290: #{mf_forward.1} parent=282 // loop_exit
            _
        $region283: #{mf_forward.1} parent=267 // pred_fallthru
          _
      $region268: #{mf_forward.1} parent=21 // pred_fallthru
        _
      // Predicated region
      $region269: #{mf_forward.1} parent=21 // pred_check
        _
      $region270: #{mf_forward.1} parent=21 // pred_check_branch
        %379 = sbr.rel (0) target = $region272
      $region271: #{mf_forward.1} parent=21 // pred_region
        %s381 = ssub.s32 2, 1
        loop: start=0, step=1, limit=1
        $region273: #{mf_forward.1} parent=271 // loop_pre_header
          _
        $region274: #{mf_forward.1} parent=271 // loop_header
          %s383 = sphi 0, %s387
          %p384 = scmp.ge.s32.totalorder %s383, 1
          %s388 = sphi %s374, %s374
          %s389 = sphi %s375, %s375
        $region275: #{mf_forward.1} parent=271 // loop_header_branch
          %386 = sbr.rel (%p384) target = $region279
        $region276: #{mf_forward.1} parent=271 // loop_body
          %v390 = vld [vmem:[%s388] sm:%s381]
          %391 = vst [vmem:[%s389] sm:%s381] %v390
        $region277: #{mf_forward.1} parent=271 // loop_footer
          %s387 = sadd.s32 1, %s383
        $region278: #{mf_forward.1} parent=271 // loop_footer_branch
          %382 = sbr.rel target = $region274
        $region279: #{mf_forward.1} parent=271 // loop_exit
          _
      $region272: #{mf_forward.1} parent=21 // pred_fallthru
        _
      // Predicated region
      $region291: #{mf_forward.1} parent=21 // pred_check
        _
      $region292: #{mf_forward.1} parent=21 // pred_check_branch
        %408 = sbr.rel (0) target = $region294
      $region293: #{mf_forward.1} parent=21 // pred_region
        %409 = vsyncadd [#allocation4], 16
      $region294: #{mf_forward.1} parent=21 // pred_fallthru
        _
      %s410 = scalar_lea.vmem [#allocation10], %s373
      %s411 = scalar_lea.vmem [#allocation3], %s370
      // Predicated region
      $region295: #{mf_forward.1} parent=21 // pred_check
        _
      $region296: #{mf_forward.1} parent=21 // pred_check_branch
        %413 = sbr.rel target = $region298
      $region297: #{mf_forward.1} parent=21 // pred_region
        // Predicated region
        $region310: #{mf_forward.1} parent=297 // pred_check
          _
        $region311: #{mf_forward.1} parent=297 // pred_check_branch
          %429 = sbr.rel (0) target = $region313
        $region312: #{mf_forward.1} parent=297 // pred_region
          %s431 = ssub.s32 2, 1
          loop: start=0, step=1, limit=1
          $region314: #{mf_forward.1} parent=312 // loop_pre_header
            _
          $region315: #{mf_forward.1} parent=312 // loop_header
            %s433 = sphi 0, %s437
            %p434 = scmp.ge.s32.totalorder %s433, 1
            %s438 = sphi %s410, %s410
            %s439 = sphi %s411, %s411
          $region316: #{mf_forward.1} parent=312 // loop_header_branch
            %436 = sbr.rel (%p434) target = $region320
          $region317: #{mf_forward.1} parent=312 // loop_body
            %v440 = vld [vmem:[%s438] sm:%s431]
            %441 = vst [vmem:[%s439] sm:%s431] %v440
          $region318: #{mf_forward.1} parent=312 // loop_footer
            %s437 = sadd.s32 1, %s433
          $region319: #{mf_forward.1} parent=312 // loop_footer_branch
            %432 = sbr.rel target = $region315
          $region320: #{mf_forward.1} parent=312 // loop_exit
            _
        $region313: #{mf_forward.1} parent=297 // pred_fallthru
          _
      $region298: #{mf_forward.1} parent=21 // pred_fallthru
        _
      // Predicated region
      $region299: #{mf_forward.1} parent=21 // pred_check
        _
      $region300: #{mf_forward.1} parent=21 // pred_check_branch
        %415 = sbr.rel (0) target = $region302
      $region301: #{mf_forward.1} parent=21 // pred_region
        %s417 = ssub.s32 2, 1
        loop: start=0, step=1, limit=1
        $region303: #{mf_forward.1} parent=301 // loop_pre_header
          _
        $region304: #{mf_forward.1} parent=301 // loop_header
          %s419 = sphi 0, %s423
          %p420 = scmp.ge.s32.totalorder %s419, 1
          %s424 = sphi %s410, %s410
          %s425 = sphi %s411, %s411
        $region305: #{mf_forward.1} parent=301 // loop_header_branch
          %422 = sbr.rel (%p420) target = $region309
        $region306: #{mf_forward.1} parent=301 // loop_body
          %v426 = vld [vmem:[%s424] sm:%s417]
          %427 = vst [vmem:[%s425] sm:%s417] %v426
        $region307: #{mf_forward.1} parent=301 // loop_footer
          %s423 = sadd.s32 1, %s419
        $region308: #{mf_forward.1} parent=301 // loop_footer_branch
          %418 = sbr.rel target = $region304
        $region309: #{mf_forward.1} parent=301 // loop_exit
          _
      $region302: #{mf_forward.1} parent=21 // pred_fallthru
        _
      // Predicated region
      $region321: #{mf_forward.1} parent=21 // pred_check
        _
      $region322: #{mf_forward.1} parent=21 // pred_check_branch
        %444 = sbr.rel (0) target = $region324
      $region323: #{mf_forward.1} parent=21 // pred_region
        %445 = vsyncadd %s107, 16
      $region324: #{mf_forward.1} parent=21 // pred_fallthru
        _
      %s446 = sadd.s32 %s65, 5
      %s447 = sadd.s32 %s58, %s446
      %s448 = sld [smem:[#allocation6 + %s447]]
      %s449 = sld [smem:[#allocation7 + %s447]]
      %s450 = scalar_lea.vmem [#allocation8], %s448
      %s451 = scalar_lea.vmem [#allocation2], %s446
      // Predicated region
      $region325: #{mf_forward.1} parent=21 // pred_check
        _
      $region326: #{mf_forward.1} parent=21 // pred_check_branch
        %453 = sbr.rel target = $region328
      $region327: #{mf_forward.1} parent=21 // pred_region
        // Predicated region
        $region340: #{mf_forward.1} parent=327 // pred_check
          _
        $region341: #{mf_forward.1} parent=327 // pred_check_branch
          %469 = sbr.rel (0) target = $region343
        $region342: #{mf_forward.1} parent=327 // pred_region
          %s471 = ssub.s32 2, 1
          loop: start=0, step=1, limit=1
          $region344: #{mf_forward.1} parent=342 // loop_pre_header
            _
          $region345: #{mf_forward.1} parent=342 // loop_header
            %s473 = sphi 0, %s477
            %p474 = scmp.ge.s32.totalorder %s473, 1
            %s478 = sphi %s450, %s450
            %s479 = sphi %s451, %s451
          $region346: #{mf_forward.1} parent=342 // loop_header_branch
            %476 = sbr.rel (%p474) target = $region350
          $region347: #{mf_forward.1} parent=342 // loop_body
            %v480 = vld [vmem:[%s478] sm:%s471]
            %481 = vst [vmem:[%s479] sm:%s471] %v480
          $region348: #{mf_forward.1} parent=342 // loop_footer
            %s477 = sadd.s32 1, %s473
          $region349: #{mf_forward.1} parent=342 // loop_footer_branch
            %472 = sbr.rel target = $region345
          $region350: #{mf_forward.1} parent=342 // loop_exit
            _
        $region343: #{mf_forward.1} parent=327 // pred_fallthru
          _
      $region328: #{mf_forward.1} parent=21 // pred_fallthru
        _
      // Predicated region
      $region329: #{mf_forward.1} parent=21 // pred_check
        _
      $region330: #{mf_forward.1} parent=21 // pred_check_branch
        %455 = sbr.rel (0) target = $region332
      $region331: #{mf_forward.1} parent=21 // pred_region
        %s457 = ssub.s32 2, 1
        loop: start=0, step=1, limit=1
        $region333: #{mf_forward.1} parent=331 // loop_pre_header
          _
        $region334: #{mf_forward.1} parent=331 // loop_header
          %s459 = sphi 0, %s463
          %p460 = scmp.ge.s32.totalorder %s459, 1
          %s464 = sphi %s450, %s450
          %s465 = sphi %s451, %s451
        $region335: #{mf_forward.1} parent=331 // loop_header_branch
          %462 = sbr.rel (%p460) target = $region339
        $region336: #{mf_forward.1} parent=331 // loop_body
          %v466 = vld [vmem:[%s464] sm:%s457]
          %467 = vst [vmem:[%s465] sm:%s457] %v466
        $region337: #{mf_forward.1} parent=331 // loop_footer
          %s463 = sadd.s32 1, %s459
        $region338: #{mf_forward.1} parent=331 // loop_footer_branch
          %458 = sbr.rel target = $region334
        $region339: #{mf_forward.1} parent=331 // loop_exit
          _
      $region332: #{mf_forward.1} parent=21 // pred_fallthru
        _
      // Predicated region
      $region351: #{mf_forward.1} parent=21 // pred_check
        _
      $region352: #{mf_forward.1} parent=21 // pred_check_branch
        %484 = sbr.rel (0) target = $region354
      $region353: #{mf_forward.1} parent=21 // pred_region
        %485 = vsyncadd [#allocation4], 16
      $region354: #{mf_forward.1} parent=21 // pred_fallthru
        _
      %s486 = scalar_lea.vmem [#allocation10], %s449
      %s487 = scalar_lea.vmem [#allocation3], %s446
      // Predicated region
      $region355: #{mf_forward.1} parent=21 // pred_check
        _
      $region356: #{mf_forward.1} parent=21 // pred_check_branch
        %489 = sbr.rel target = $region358
      $region357: #{mf_forward.1} parent=21 // pred_region
        // Predicated region
        $region370: #{mf_forward.1} parent=357 // pred_check
          _
        $region371: #{mf_forward.1} parent=357 // pred_check_branch
          %505 = sbr.rel (0) target = $region373
        $region372: #{mf_forward.1} parent=357 // pred_region
          %s507 = ssub.s32 2, 1
          loop: start=0, step=1, limit=1
          $region374: #{mf_forward.1} parent=372 // loop_pre_header
            _
          $region375: #{mf_forward.1} parent=372 // loop_header
            %s509 = sphi 0, %s513
            %p510 = scmp.ge.s32.totalorder %s509, 1
            %s514 = sphi %s486, %s486
            %s515 = sphi %s487, %s487
          $region376: #{mf_forward.1} parent=372 // loop_header_branch
            %512 = sbr.rel (%p510) target = $region380
          $region377: #{mf_forward.1} parent=372 // loop_body
            %v516 = vld [vmem:[%s514] sm:%s507]
            %517 = vst [vmem:[%s515] sm:%s507] %v516
          $region378: #{mf_forward.1} parent=372 // loop_footer
            %s513 = sadd.s32 1, %s509
          $region379: #{mf_forward.1} parent=372 // loop_footer_branch
            %508 = sbr.rel target = $region375
          $region380: #{mf_forward.1} parent=372 // loop_exit
            _
        $region373: #{mf_forward.1} parent=357 // pred_fallthru
          _
      $region358: #{mf_forward.1} parent=21 // pred_fallthru
        _
      // Predicated region
      $region359: #{mf_forward.1} parent=21 // pred_check
        _
      $region360: #{mf_forward.1} parent=21 // pred_check_branch
        %491 = sbr.rel (0) target = $region362
      $region361: #{mf_forward.1} parent=21 // pred_region
        %s493 = ssub.s32 2, 1
        loop: start=0, step=1, limit=1
        $region363: #{mf_forward.1} parent=361 // loop_pre_header
          _
        $region364: #{mf_forward.1} parent=361 // loop_header
          %s495 = sphi 0, %s499
          %p496 = scmp.ge.s32.totalorder %s495, 1
          %s500 = sphi %s486, %s486
          %s501 = sphi %s487, %s487
        $region365: #{mf_forward.1} parent=361 // loop_header_branch
          %498 = sbr.rel (%p496) target = $region369
        $region366: #{mf_forward.1} parent=361 // loop_body
          %v502 = vld [vmem:[%s500] sm:%s493]
          %503 = vst [vmem:[%s501] sm:%s493] %v502
        $region367: #{mf_forward.1} parent=361 // loop_footer
          %s499 = sadd.s32 1, %s495
        $region368: #{mf_forward.1} parent=361 // loop_footer_branch
          %494 = sbr.rel target = $region364
        $region369: #{mf_forward.1} parent=361 // loop_exit
          _
      $region362: #{mf_forward.1} parent=21 // pred_fallthru
        _
      // Predicated region
      $region381: #{mf_forward.1} parent=21 // pred_check
        _
      $region382: #{mf_forward.1} parent=21 // pred_check_branch
        %520 = sbr.rel (0) target = $region384
      $region383: #{mf_forward.1} parent=21 // pred_region
        %521 = vsyncadd %s107, 16
      $region384: #{mf_forward.1} parent=21 // pred_fallthru
        _
      %s522 = sadd.s32 %s65, 6
      %s523 = sadd.s32 %s58, %s522
      %s524 = sld [smem:[#allocation6 + %s523]]
      %s525 = sld [smem:[#allocation7 + %s523]]
      %s526 = scalar_lea.vmem [#allocation8], %s524
      %s527 = scalar_lea.vmem [#allocation2], %s522
      // Predicated region
      $region385: #{mf_forward.1} parent=21 // pred_check
        _
      $region386: #{mf_forward.1} parent=21 // pred_check_branch
        %529 = sbr.rel target = $region388
      $region387: #{mf_forward.1} parent=21 // pred_region
        // Predicated region
        $region400: #{mf_forward.1} parent=387 // pred_check
          _
        $region401: #{mf_forward.1} parent=387 // pred_check_branch
          %545 = sbr.rel (0) target = $region403
        $region402: #{mf_forward.1} parent=387 // pred_region
          %s547 = ssub.s32 2, 1
          loop: start=0, step=1, limit=1
          $region404: #{mf_forward.1} parent=402 // loop_pre_header
            _
          $region405: #{mf_forward.1} parent=402 // loop_header
            %s549 = sphi 0, %s553
            %p550 = scmp.ge.s32.totalorder %s549, 1
            %s554 = sphi %s526, %s526
            %s555 = sphi %s527, %s527
          $region406: #{mf_forward.1} parent=402 // loop_header_branch
            %552 = sbr.rel (%p550) target = $region410
          $region407: #{mf_forward.1} parent=402 // loop_body
            %v556 = vld [vmem:[%s554] sm:%s547]
            %557 = vst [vmem:[%s555] sm:%s547] %v556
          $region408: #{mf_forward.1} parent=402 // loop_footer
            %s553 = sadd.s32 1, %s549
          $region409: #{mf_forward.1} parent=402 // loop_footer_branch
            %548 = sbr.rel target = $region405
          $region410: #{mf_forward.1} parent=402 // loop_exit
            _
        $region403: #{mf_forward.1} parent=387 // pred_fallthru
          _
      $region388: #{mf_forward.1} parent=21 // pred_fallthru
        _
      // Predicated region
      $region389: #{mf_forward.1} parent=21 // pred_check
        _
      $region390: #{mf_forward.1} parent=21 // pred_check_branch
        %531 = sbr.rel (0) target = $region392
      $region391: #{mf_forward.1} parent=21 // pred_region
        %s533 = ssub.s32 2, 1
        loop: start=0, step=1, limit=1
        $region393: #{mf_forward.1} parent=391 // loop_pre_header
          _
        $region394: #{mf_forward.1} parent=391 // loop_header
          %s535 = sphi 0, %s539
          %p536 = scmp.ge.s32.totalorder %s535, 1
          %s540 = sphi %s526, %s526
          %s541 = sphi %s527, %s527
        $region395: #{mf_forward.1} parent=391 // loop_header_branch
          %538 = sbr.rel (%p536) target = $region399
        $region396: #{mf_forward.1} parent=391 // loop_body
          %v542 = vld [vmem:[%s540] sm:%s533]
          %543 = vst [vmem:[%s541] sm:%s533] %v542
        $region397: #{mf_forward.1} parent=391 // loop_footer
          %s539 = sadd.s32 1, %s535
        $region398: #{mf_forward.1} parent=391 // loop_footer_branch
          %534 = sbr.rel target = $region394
        $region399: #{mf_forward.1} parent=391 // loop_exit
          _
      $region392: #{mf_forward.1} parent=21 // pred_fallthru
        _
      // Predicated region
      $region411: #{mf_forward.1} parent=21 // pred_check
        _
      $region412: #{mf_forward.1} parent=21 // pred_check_branch
        %560 = sbr.rel (0) target = $region414
      $region413: #{mf_forward.1} parent=21 // pred_region
        %561 = vsyncadd [#allocation4], 16
      $region414: #{mf_forward.1} parent=21 // pred_fallthru
        _
      %s562 = scalar_lea.vmem [#allocation10], %s525
      %s563 = scalar_lea.vmem [#allocation3], %s522
      // Predicated region
      $region415: #{mf_forward.1} parent=21 // pred_check
        _
      $region416: #{mf_forward.1} parent=21 // pred_check_branch
        %565 = sbr.rel target = $region418
      $region417: #{mf_forward.1} parent=21 // pred_region
        // Predicated region
        $region430: #{mf_forward.1} parent=417 // pred_check
          _
        $region431: #{mf_forward.1} parent=417 // pred_check_branch
          %581 = sbr.rel (0) target = $region433
        $region432: #{mf_forward.1} parent=417 // pred_region
          %s583 = ssub.s32 2, 1
          loop: start=0, step=1, limit=1
          $region434: #{mf_forward.1} parent=432 // loop_pre_header
            _
          $region435: #{mf_forward.1} parent=432 // loop_header
            %s585 = sphi 0, %s589
            %p586 = scmp.ge.s32.totalorder %s585, 1
            %s590 = sphi %s562, %s562
            %s591 = sphi %s563, %s563
          $region436: #{mf_forward.1} parent=432 // loop_header_branch
            %588 = sbr.rel (%p586) target = $region440
          $region437: #{mf_forward.1} parent=432 // loop_body
            %v592 = vld [vmem:[%s590] sm:%s583]
            %593 = vst [vmem:[%s591] sm:%s583] %v592
          $region438: #{mf_forward.1} parent=432 // loop_footer
            %s589 = sadd.s32 1, %s585
          $region439: #{mf_forward.1} parent=432 // loop_footer_branch
            %584 = sbr.rel target = $region435
          $region440: #{mf_forward.1} parent=432 // loop_exit
            _
        $region433: #{mf_forward.1} parent=417 // pred_fallthru
          _
      $region418: #{mf_forward.1} parent=21 // pred_fallthru
        _
      // Predicated region
      $region419: #{mf_forward.1} parent=21 // pred_check
        _
      $region420: #{mf_forward.1} parent=21 // pred_check_branch
        %567 = sbr.rel (0) target = $region422
      $region421: #{mf_forward.1} parent=21 // pred_region
        %s569 = ssub.s32 2, 1
        loop: start=0, step=1, limit=1
        $region423: #{mf_forward.1} parent=421 // loop_pre_header
          _
        $region424: #{mf_forward.1} parent=421 // loop_header
          %s571 = sphi 0, %s575
          %p572 = scmp.ge.s32.totalorder %s571, 1
          %s576 = sphi %s562, %s562
          %s577 = sphi %s563, %s563
        $region425: #{mf_forward.1} parent=421 // loop_header_branch
          %574 = sbr.rel (%p572) target = $region429
        $region426: #{mf_forward.1} parent=421 // loop_body
          %v578 = vld [vmem:[%s576] sm:%s569]
          %579 = vst [vmem:[%s577] sm:%s569] %v578
        $region427: #{mf_forward.1} parent=421 // loop_footer
          %s575 = sadd.s32 1, %s571
        $region428: #{mf_forward.1} parent=421 // loop_footer_branch
          %570 = sbr.rel target = $region424
        $region429: #{mf_forward.1} parent=421 // loop_exit
          _
      $region422: #{mf_forward.1} parent=21 // pred_fallthru
        _
      // Predicated region
      $region441: #{mf_forward.1} parent=21 // pred_check
        _
      $region442: #{mf_forward.1} parent=21 // pred_check_branch
        %596 = sbr.rel (0) target = $region444
      $region443: #{mf_forward.1} parent=21 // pred_region
        %597 = vsyncadd %s107, 16
      $region444: #{mf_forward.1} parent=21 // pred_fallthru
        _
      %s598 = sadd.s32 %s65, 7
      %s599 = sadd.s32 %s58, %s598
      %s600 = sld [smem:[#allocation6 + %s599]]
      %s601 = sld [smem:[#allocation7 + %s599]]
      %s602 = scalar_lea.vmem [#allocation8], %s600
      %s603 = scalar_lea.vmem [#allocation2], %s598
      // Predicated region
      $region445: #{mf_forward.1} parent=21 // pred_check
        _
      $region446: #{mf_forward.1} parent=21 // pred_check_branch
        %605 = sbr.rel target = $region448
      $region447: #{mf_forward.1} parent=21 // pred_region
        // Predicated region
        $region460: #{mf_forward.1} parent=447 // pred_check
          _
        $region461: #{mf_forward.1} parent=447 // pred_check_branch
          %621 = sbr.rel (0) target = $region463
        $region462: #{mf_forward.1} parent=447 // pred_region
          %s623 = ssub.s32 2, 1
          loop: start=0, step=1, limit=1
          $region464: #{mf_forward.1} parent=462 // loop_pre_header
            _
          $region465: #{mf_forward.1} parent=462 // loop_header
            %s625 = sphi 0, %s629
            %p626 = scmp.ge.s32.totalorder %s625, 1
            %s630 = sphi %s602, %s602
            %s631 = sphi %s603, %s603
          $region466: #{mf_forward.1} parent=462 // loop_header_branch
            %628 = sbr.rel (%p626) target = $region470
          $region467: #{mf_forward.1} parent=462 // loop_body
            %v632 = vld [vmem:[%s630] sm:%s623]
            %633 = vst [vmem:[%s631] sm:%s623] %v632
          $region468: #{mf_forward.1} parent=462 // loop_footer
            %s629 = sadd.s32 1, %s625
          $region469: #{mf_forward.1} parent=462 // loop_footer_branch
            %624 = sbr.rel target = $region465
          $region470: #{mf_forward.1} parent=462 // loop_exit
            _
        $region463: #{mf_forward.1} parent=447 // pred_fallthru
          _
      $region448: #{mf_forward.1} parent=21 // pred_fallthru
        _
      // Predicated region
      $region449: #{mf_forward.1} parent=21 // pred_check
        _
      $region450: #{mf_forward.1} parent=21 // pred_check_branch
        %607 = sbr.rel (0) target = $region452
      $region451: #{mf_forward.1} parent=21 // pred_region
        %s609 = ssub.s32 2, 1
        loop: start=0, step=1, limit=1
        $region453: #{mf_forward.1} parent=451 // loop_pre_header
          _
        $region454: #{mf_forward.1} parent=451 // loop_header
          %s611 = sphi 0, %s615
          %p612 = scmp.ge.s32.totalorder %s611, 1
          %s616 = sphi %s602, %s602
          %s617 = sphi %s603, %s603
        $region455: #{mf_forward.1} parent=451 // loop_header_branch
          %614 = sbr.rel (%p612) target = $region459
        $region456: #{mf_forward.1} parent=451 // loop_body
          %v618 = vld [vmem:[%s616] sm:%s609]
          %619 = vst [vmem:[%s617] sm:%s609] %v618
        $region457: #{mf_forward.1} parent=451 // loop_footer
          %s615 = sadd.s32 1, %s611
        $region458: #{mf_forward.1} parent=451 // loop_footer_branch
          %610 = sbr.rel target = $region454
        $region459: #{mf_forward.1} parent=451 // loop_exit
          _
      $region452: #{mf_forward.1} parent=21 // pred_fallthru
        _
      // Predicated region
      $region471: #{mf_forward.1} parent=21 // pred_check
        _
      $region472: #{mf_forward.1} parent=21 // pred_check_branch
        %636 = sbr.rel (0) target = $region474
      $region473: #{mf_forward.1} parent=21 // pred_region
        %637 = vsyncadd [#allocation4], 16
      $region474: #{mf_forward.1} parent=21 // pred_fallthru
        _
      %s638 = scalar_lea.vmem [#allocation10], %s601
      %s639 = scalar_lea.vmem [#allocation3], %s598
      // Predicated region
      $region475: #{mf_forward.1} parent=21 // pred_check
        _
      $region476: #{mf_forward.1} parent=21 // pred_check_branch
        %641 = sbr.rel target = $region478
      $region477: #{mf_forward.1} parent=21 // pred_region
        // Predicated region
        $region490: #{mf_forward.1} parent=477 // pred_check
          _
        $region491: #{mf_forward.1} parent=477 // pred_check_branch
          %657 = sbr.rel (0) target = $region493
        $region492: #{mf_forward.1} parent=477 // pred_region
          %s659 = ssub.s32 2, 1
          loop: start=0, step=1, limit=1
          $region494: #{mf_forward.1} parent=492 // loop_pre_header
            _
          $region495: #{mf_forward.1} parent=492 // loop_header
            %s661 = sphi 0, %s665
            %p662 = scmp.ge.s32.totalorder %s661, 1
            %s666 = sphi %s638, %s638
            %s667 = sphi %s639, %s639
          $region496: #{mf_forward.1} parent=492 // loop_header_branch
            %664 = sbr.rel (%p662) target = $region500
          $region497: #{mf_forward.1} parent=492 // loop_body
            %v668 = vld [vmem:[%s666] sm:%s659]
            %669 = vst [vmem:[%s667] sm:%s659] %v668
          $region498: #{mf_forward.1} parent=492 // loop_footer
            %s665 = sadd.s32 1, %s661
          $region499: #{mf_forward.1} parent=492 // loop_footer_branch
            %660 = sbr.rel target = $region495
          $region500: #{mf_forward.1} parent=492 // loop_exit
            _
        $region493: #{mf_forward.1} parent=477 // pred_fallthru
          _
      $region478: #{mf_forward.1} parent=21 // pred_fallthru
        _
      // Predicated region
      $region479: #{mf_forward.1} parent=21 // pred_check
        _
      $region480: #{mf_forward.1} parent=21 // pred_check_branch
        %643 = sbr.rel (0) target = $region482
      $region481: #{mf_forward.1} parent=21 // pred_region
        %s645 = ssub.s32 2, 1
        loop: start=0, step=1, limit=1
        $region483: #{mf_forward.1} parent=481 // loop_pre_header
          _
        $region484: #{mf_forward.1} parent=481 // loop_header
          %s647 = sphi 0, %s651
          %p648 = scmp.ge.s32.totalorder %s647, 1
          %s652 = sphi %s638, %s638
          %s653 = sphi %s639, %s639
        $region485: #{mf_forward.1} parent=481 // loop_header_branch
          %650 = sbr.rel (%p648) target = $region489
        $region486: #{mf_forward.1} parent=481 // loop_body
          %v654 = vld [vmem:[%s652] sm:%s645]
          %655 = vst [vmem:[%s653] sm:%s645] %v654
        $region487: #{mf_forward.1} parent=481 // loop_footer
          %s651 = sadd.s32 1, %s647
        $region488: #{mf_forward.1} parent=481 // loop_footer_branch
          %646 = sbr.rel target = $region484
        $region489: #{mf_forward.1} parent=481 // loop_exit
          _
      $region482: #{mf_forward.1} parent=21 // pred_fallthru
        _
      // Predicated region
      $region501: #{mf_forward.1} parent=21 // pred_check
        _
      $region502: #{mf_forward.1} parent=21 // pred_check_branch
        %672 = sbr.rel (0) target = $region504
      $region503: #{mf_forward.1} parent=21 // pred_region
        %673 = vsyncadd %s107, 16
      $region504: #{mf_forward.1} parent=21 // pred_fallthru
        _
    $region22: #{mf_forward.1} parent=1 // loop_footer
      %s64 = sadd.s32 1, %s60
    $region23: #{mf_forward.1} parent=1 // loop_footer_branch
      %59 = sbr.rel target = $region19
    $region24: #{mf_forward.1} parent=1 // loop_exit
      _
    %s674 = smul.u32 128, 1
    %s675 = sshll.u32 %s674, 4
    %676 = dma.done [#allocation4], %s675
    %s677 = scalar_lea.sflag [#allocation4], 1
    %s678 = sshll.u32 %s674, 4
    %679 = dma.done %s677, %s678
    %v680 = vld [vmem:[#allocation2] sm:$0xff]
    %v681 = vld [vmem:[#allocation2 + $0x8] sm:$0xff]
    %v682 = vld [vmem:[#allocation2 + $0x10] sm:$0xff]
    %v683 = vld [vmem:[#allocation2 + $0x18] sm:$0xff]
    %v684 = vld [vmem:[#allocation2 + $0x20] sm:$0xff]
    %v685 = vld [vmem:[#allocation2 + $0x28] sm:$0xff]
    %v686 = vld [vmem:[#allocation2 + $0x30] sm:$0xff]
    %v687 = vld [vmem:[#allocation2 + $0x38] sm:$0xff]
    %v688 = vld [vmem:[#allocation2 + $0x40] sm:$0xff]
    %v689 = vld [vmem:[#allocation2 + $0x48] sm:$0xff]
    %v690 = vld [vmem:[#allocation2 + $0x50] sm:$0xff]
    %v691 = vld [vmem:[#allocation2 + $0x58] sm:$0xff]
    %v692 = vld [vmem:[#allocation2 + $0x60] sm:$0xff]
    %v693 = vld [vmem:[#allocation2 + $0x68] sm:$0xff]
    %v694 = vld [vmem:[#allocation2 + $0x70] sm:$0xff]
    %v695 = vld [vmem:[#allocation2 + $0x78] sm:$0xff]
    %v696 = vld [vmem:[#allocation3] sm:$0xff]
    %v697 = vld [vmem:[#allocation3 + $0x8] sm:$0xff]
    %v698 = vld [vmem:[#allocation3 + $0x10] sm:$0xff]
    %v699 = vld [vmem:[#allocation3 + $0x18] sm:$0xff]
    %v700 = vld [vmem:[#allocation3 + $0x20] sm:$0xff]
    %v701 = vld [vmem:[#allocation3 + $0x28] sm:$0xff]
    %v702 = vld [vmem:[#allocation3 + $0x30] sm:$0xff]
    %v703 = vld [vmem:[#allocation3 + $0x38] sm:$0xff]
    %v704 = vld [vmem:[#allocation3 + $0x40] sm:$0xff]
    %v705 = vld [vmem:[#allocation3 + $0x48] sm:$0xff]
    %v706 = vld [vmem:[#allocation3 + $0x50] sm:$0xff]
    %v707 = vld [vmem:[#allocation3 + $0x58] sm:$0xff]
    %v708 = vld [vmem:[#allocation3 + $0x60] sm:$0xff]
    %v709 = vld [vmem:[#allocation3 + $0x68] sm:$0xff]
    %v710 = vld [vmem:[#allocation3 + $0x70] sm:$0xff]
    %v711 = vld [vmem:[#allocation3 + $0x78] sm:$0xff]
    %v712 = vmul.f32 %v680, %v696
    %v713 = vmul.f32 %v681, %v697
    %v714 = vmul.f32 %v682, %v698
    %v715 = vmul.f32 %v683, %v699
    %v716 = vmul.f32 %v684, %v700
    %v717 = vmul.f32 %v685, %v701
    %v718 = vmul.f32 %v686, %v702
    %v719 = vmul.f32 %v687, %v703
    %v720 = vmul.f32 %v688, %v704
    %v721 = vmul.f32 %v689, %v705
    %v722 = vmul.f32 %v690, %v706
    %v723 = vmul.f32 %v691, %v707
    %v724 = vmul.f32 %v692, %v708
    %v725 = vmul.f32 %v693, %v709
    %v726 = vmul.f32 %v694, %v710
    %v727 = vmul.f32 %v695, %v711
    %728 = vadd.xlane.f32.xlu0 %v712
    %v729 = vpop.xlane.xlu0 %728
    %730 = vadd.xlane.f32.xlu0 %v713
    %v731 = vpop.xlane.xlu0 %730
    %732 = vadd.xlane.f32.xlu0 %v714
    %v733 = vpop.xlane.xlu0 %732
    %734 = vadd.xlane.f32.xlu0 %v715
    %v735 = vpop.xlane.xlu0 %734
    %736 = vadd.xlane.f32.xlu0 %v716
    %v737 = vpop.xlane.xlu0 %736
    %738 = vadd.xlane.f32.xlu0 %v717
    %v739 = vpop.xlane.xlu0 %738
    %740 = vadd.xlane.f32.xlu0 %v718
    %v741 = vpop.xlane.xlu0 %740
    %742 = vadd.xlane.f32.xlu0 %v719
    %v743 = vpop.xlane.xlu0 %742
    %744 = vadd.xlane.f32.xlu0 %v720
    %v745 = vpop.xlane.xlu0 %744
    %746 = vadd.xlane.f32.xlu0 %v721
    %v747 = vpop.xlane.xlu0 %746
    %748 = vadd.xlane.f32.xlu0 %v722
    %v749 = vpop.xlane.xlu0 %748
    %750 = vadd.xlane.f32.xlu0 %v723
    %v751 = vpop.xlane.xlu0 %750
    %752 = vadd.xlane.f32.xlu0 %v724
    %v753 = vpop.xlane.xlu0 %752
    %754 = vadd.xlane.f32.xlu0 %v725
    %v755 = vpop.xlane.xlu0 %754
    %756 = vadd.xlane.f32.xlu0 %v726
    %v757 = vpop.xlane.xlu0 %756
    %758 = vadd.xlane.f32.xlu0 %v727
    %v759 = vpop.xlane.xlu0 %758
    %v760 = vxor.u32 %v729, 2147483648
    %v761 = vxor.u32 %v731, 2147483648
    %v762 = vxor.u32 %v733, 2147483648
    %v763 = vxor.u32 %v735, 2147483648
    %v764 = vxor.u32 %v737, 2147483648
    %v765 = vxor.u32 %v739, 2147483648
    %v766 = vxor.u32 %v741, 2147483648
    %v767 = vxor.u32 %v743, 2147483648
    %v768 = vxor.u32 %v745, 2147483648
    %v769 = vxor.u32 %v747, 2147483648
    %v770 = vxor.u32 %v749, 2147483648
    %v771 = vxor.u32 %v751, 2147483648
    %v772 = vxor.u32 %v753, 2147483648
    %v773 = vxor.u32 %v755, 2147483648
    %v774 = vxor.u32 %v757, 2147483648
    %v775 = vxor.u32 %v759, 2147483648
    %v776 = vmul.f32 %v760, 1.442695
    %v777 = vpow.pop %v776
    %v778 = vmul.f32 %v761, 1.442695
    %v779 = vpow.pop %v778
    %v780 = vmul.f32 %v762, 1.442695
    %v781 = vpow.pop %v780
    %v782 = vmul.f32 %v763, 1.442695
    %v783 = vpow.pop %v782
    %v784 = vmul.f32 %v764, 1.442695
    %v785 = vpow.pop %v784
    %v786 = vmul.f32 %v765, 1.442695
    %v787 = vpow.pop %v786
    %v788 = vmul.f32 %v766, 1.442695
    %v789 = vpow.pop %v788
    %v790 = vmul.f32 %v767, 1.442695
    %v791 = vpow.pop %v790
    %v792 = vmul.f32 %v768, 1.442695
    %v793 = vpow.pop %v792
    %v794 = vmul.f32 %v769, 1.442695
    %v795 = vpow.pop %v794
    %v796 = vmul.f32 %v770, 1.442695
    %v797 = vpow.pop %v796
    %v798 = vmul.f32 %v771, 1.442695
    %v799 = vpow.pop %v798
    %v800 = vmul.f32 %v772, 1.442695
    %v801 = vpow.pop %v800
    %v802 = vmul.f32 %v773, 1.442695
    %v803 = vpow.pop %v802
    %v804 = vmul.f32 %v774, 1.442695
    %v805 = vpow.pop %v804
    %v806 = vmul.f32 %v775, 1.442695
    %v807 = vpow.pop %v806
    %v808 = vadd.f32 %v777, 1.0
    %v809 = vadd.f32 %v779, 1.0
    %v810 = vadd.f32 %v781, 1.0
    %v811 = vadd.f32 %v783, 1.0
    %v812 = vadd.f32 %v785, 1.0
    %v813 = vadd.f32 %v787, 1.0
    %v814 = vadd.f32 %v789, 1.0
    %v815 = vadd.f32 %v791, 1.0
    %v816 = vadd.f32 %v793, 1.0
    %v817 = vadd.f32 %v795, 1.0
    %v818 = vadd.f32 %v797, 1.0
    %v819 = vadd.f32 %v799, 1.0
    %v820 = vadd.f32 %v801, 1.0
    %v821 = vadd.f32 %v803, 1.0
    %v822 = vadd.f32 %v805, 1.0
    %v823 = vadd.f32 %v807, 1.0
    %v824 = vrcp.pop %v808
    %v825 = vmul.f32 %v808, %v824
    %v826 = vsub.f32 1.0, %v825
    %v827 = vmul.f32 %v824, %v826
    %v828 = vadd.f32 %v824, %v827
    %vm829 = vweird.f32 %v808
    %vm830 = vweird.f32 %v824
    %vm831 = vmor %vm829, %vm830
    %v832 = vsel %vm831, %v824, %v828
    %v833 = vand.u32 2147483647, %v808
    %vm834 = vcmp.eq.f32.partialorder %v833, 8.507059e+37
    %v835 = vand.u32 %v808, 2147483648
    %v836 = vor.u32 1.1754944e-38, %v835
    %v837 = vsel %vm834, %v836, %v832
    %v838 = vmul.f32 1.0, %v837
    %v839 = vrcp.pop %v809
    %v840 = vmul.f32 %v809, %v839
    %v841 = vsub.f32 1.0, %v840
    %v842 = vmul.f32 %v839, %v841
    %v843 = vadd.f32 %v839, %v842
    %vm844 = vweird.f32 %v809
    %vm845 = vweird.f32 %v839
    %vm846 = vmor %vm844, %vm845
    %v847 = vsel %vm846, %v839, %v843
    %v848 = vand.u32 2147483647, %v809
    %vm849 = vcmp.eq.f32.partialorder %v848, 8.507059e+37
    %v850 = vand.u32 %v809, 2147483648
    %v851 = vor.u32 1.1754944e-38, %v850
    %v852 = vsel %vm849, %v851, %v847
    %v853 = vmul.f32 1.0, %v852
    %v854 = vrcp.pop %v810
    %v855 = vmul.f32 %v810, %v854
    %v856 = vsub.f32 1.0, %v855
    %v857 = vmul.f32 %v854, %v856
    %v858 = vadd.f32 %v854, %v857
    %vm859 = vweird.f32 %v810
    %vm860 = vweird.f32 %v854
    %vm861 = vmor %vm859, %vm860
    %v862 = vsel %vm861, %v854, %v858
    %v863 = vand.u32 2147483647, %v810
    %vm864 = vcmp.eq.f32.partialorder %v863, 8.507059e+37
    %v865 = vand.u32 %v810, 2147483648
    %v866 = vor.u32 1.1754944e-38, %v865
    %v867 = vsel %vm864, %v866, %v862
    %v868 = vmul.f32 1.0, %v867
    %v869 = vrcp.pop %v811
    %v870 = vmul.f32 %v811, %v869
    %v871 = vsub.f32 1.0, %v870
    %v872 = vmul.f32 %v869, %v871
    %v873 = vadd.f32 %v869, %v872
    %vm874 = vweird.f32 %v811
    %vm875 = vweird.f32 %v869
    %vm876 = vmor %vm874, %vm875
    %v877 = vsel %vm876, %v869, %v873
    %v878 = vand.u32 2147483647, %v811
    %vm879 = vcmp.eq.f32.partialorder %v878, 8.507059e+37
    %v880 = vand.u32 %v811, 2147483648
    %v881 = vor.u32 1.1754944e-38, %v880
    %v882 = vsel %vm879, %v881, %v877
    %v883 = vmul.f32 1.0, %v882
    %v884 = vrcp.pop %v812
    %v885 = vmul.f32 %v812, %v884
    %v886 = vsub.f32 1.0, %v885
    %v887 = vmul.f32 %v884, %v886
    %v888 = vadd.f32 %v884, %v887
    %vm889 = vweird.f32 %v812
    %vm890 = vweird.f32 %v884
    %vm891 = vmor %vm889, %vm890
    %v892 = vsel %vm891, %v884, %v888
    %v893 = vand.u32 2147483647, %v812
    %vm894 = vcmp.eq.f32.partialorder %v893, 8.507059e+37
    %v895 = vand.u32 %v812, 2147483648
    %v896 = vor.u32 1.1754944e-38, %v895
    %v897 = vsel %vm894, %v896, %v892
    %v898 = vmul.f32 1.0, %v897
    %v899 = vrcp.pop %v813
    %v900 = vmul.f32 %v813, %v899
    %v901 = vsub.f32 1.0, %v900
    %v902 = vmul.f32 %v899, %v901
    %v903 = vadd.f32 %v899, %v902
    %vm904 = vweird.f32 %v813
    %vm905 = vweird.f32 %v899
    %vm906 = vmor %vm904, %vm905
    %v907 = vsel %vm906, %v899, %v903
    %v908 = vand.u32 2147483647, %v813
    %vm909 = vcmp.eq.f32.partialorder %v908, 8.507059e+37
    %v910 = vand.u32 %v813, 2147483648
    %v911 = vor.u32 1.1754944e-38, %v910
    %v912 = vsel %vm909, %v911, %v907
    %v913 = vmul.f32 1.0, %v912
    %v914 = vrcp.pop %v814
    %v915 = vmul.f32 %v814, %v914
    %v916 = vsub.f32 1.0, %v915
    %v917 = vmul.f32 %v914, %v916
    %v918 = vadd.f32 %v914, %v917
    %vm919 = vweird.f32 %v814
    %vm920 = vweird.f32 %v914
    %vm921 = vmor %vm919, %vm920
    %v922 = vsel %vm921, %v914, %v918
    %v923 = vand.u32 2147483647, %v814
    %vm924 = vcmp.eq.f32.partialorder %v923, 8.507059e+37
    %v925 = vand.u32 %v814, 2147483648
    %v926 = vor.u32 1.1754944e-38, %v925
    %v927 = vsel %vm924, %v926, %v922
    %v928 = vmul.f32 1.0, %v927
    %v929 = vrcp.pop %v815
    %v930 = vmul.f32 %v815, %v929
    %v931 = vsub.f32 1.0, %v930
    %v932 = vmul.f32 %v929, %v931
    %v933 = vadd.f32 %v929, %v932
    %vm934 = vweird.f32 %v815
    %vm935 = vweird.f32 %v929
    %vm936 = vmor %vm934, %vm935
    %v937 = vsel %vm936, %v929, %v933
    %v938 = vand.u32 2147483647, %v815
    %vm939 = vcmp.eq.f32.partialorder %v938, 8.507059e+37
    %v940 = vand.u32 %v815, 2147483648
    %v941 = vor.u32 1.1754944e-38, %v940
    %v942 = vsel %vm939, %v941, %v937
    %v943 = vmul.f32 1.0, %v942
    %v944 = vrcp.pop %v816
    %v945 = vmul.f32 %v816, %v944
    %v946 = vsub.f32 1.0, %v945
    %v947 = vmul.f32 %v944, %v946
    %v948 = vadd.f32 %v944, %v947
    %vm949 = vweird.f32 %v816
    %vm950 = vweird.f32 %v944
    %vm951 = vmor %vm949, %vm950
    %v952 = vsel %vm951, %v944, %v948
    %v953 = vand.u32 2147483647, %v816
    %vm954 = vcmp.eq.f32.partialorder %v953, 8.507059e+37
    %v955 = vand.u32 %v816, 2147483648
    %v956 = vor.u32 1.1754944e-38, %v955
    %v957 = vsel %vm954, %v956, %v952
    %v958 = vmul.f32 1.0, %v957
    %v959 = vrcp.pop %v817
    %v960 = vmul.f32 %v817, %v959
    %v961 = vsub.f32 1.0, %v960
    %v962 = vmul.f32 %v959, %v961
    %v963 = vadd.f32 %v959, %v962
    %vm964 = vweird.f32 %v817
    %vm965 = vweird.f32 %v959
    %vm966 = vmor %vm964, %vm965
    %v967 = vsel %vm966, %v959, %v963
    %v968 = vand.u32 2147483647, %v817
    %vm969 = vcmp.eq.f32.partialorder %v968, 8.507059e+37
    %v970 = vand.u32 %v817, 2147483648
    %v971 = vor.u32 1.1754944e-38, %v970
    %v972 = vsel %vm969, %v971, %v967
    %v973 = vmul.f32 1.0, %v972
    %v974 = vrcp.pop %v818
    %v975 = vmul.f32 %v818, %v974
    %v976 = vsub.f32 1.0, %v975
    %v977 = vmul.f32 %v974, %v976
    %v978 = vadd.f32 %v974, %v977
    %vm979 = vweird.f32 %v818
    %vm980 = vweird.f32 %v974
    %vm981 = vmor %vm979, %vm980
    %v982 = vsel %vm981, %v974, %v978
    %v983 = vand.u32 2147483647, %v818
    %vm984 = vcmp.eq.f32.partialorder %v983, 8.507059e+37
    %v985 = vand.u32 %v818, 2147483648
    %v986 = vor.u32 1.1754944e-38, %v985
    %v987 = vsel %vm984, %v986, %v982
    %v988 = vmul.f32 1.0, %v987
    %v989 = vrcp.pop %v819
    %v990 = vmul.f32 %v819, %v989
    %v991 = vsub.f32 1.0, %v990
    %v992 = vmul.f32 %v989, %v991
    %v993 = vadd.f32 %v989, %v992
    %vm994 = vweird.f32 %v819
    %vm995 = vweird.f32 %v989
    %vm996 = vmor %vm994, %vm995
    %v997 = vsel %vm996, %v989, %v993
    %v998 = vand.u32 2147483647, %v819
    %vm999 = vcmp.eq.f32.partialorder %v998, 8.507059e+37
    %v1000 = vand.u32 %v819, 2147483648
    %v1001 = vor.u32 1.1754944e-38, %v1000
    %v1002 = vsel %vm999, %v1001, %v997
    %v1003 = vmul.f32 1.0, %v1002
    %v1004 = vrcp.pop %v820
    %v1005 = vmul.f32 %v820, %v1004
    %v1006 = vsub.f32 1.0, %v1005
    %v1007 = vmul.f32 %v1004, %v1006
    %v1008 = vadd.f32 %v1004, %v1007
    %vm1009 = vweird.f32 %v820
    %vm1010 = vweird.f32 %v1004
    %vm1011 = vmor %vm1009, %vm1010
    %v1012 = vsel %vm1011, %v1004, %v1008
    %v1013 = vand.u32 2147483647, %v820
    %vm1014 = vcmp.eq.f32.partialorder %v1013, 8.507059e+37
    %v1015 = vand.u32 %v820, 2147483648
    %v1016 = vor.u32 1.1754944e-38, %v1015
    %v1017 = vsel %vm1014, %v1016, %v1012
    %v1018 = vmul.f32 1.0, %v1017
    %v1019 = vrcp.pop %v821
    %v1020 = vmul.f32 %v821, %v1019
    %v1021 = vsub.f32 1.0, %v1020
    %v1022 = vmul.f32 %v1019, %v1021
    %v1023 = vadd.f32 %v1019, %v1022
    %vm1024 = vweird.f32 %v821
    %vm1025 = vweird.f32 %v1019
    %vm1026 = vmor %vm1024, %vm1025
    %v1027 = vsel %vm1026, %v1019, %v1023
    %v1028 = vand.u32 2147483647, %v821
    %vm1029 = vcmp.eq.f32.partialorder %v1028, 8.507059e+37
    %v1030 = vand.u32 %v821, 2147483648
    %v1031 = vor.u32 1.1754944e-38, %v1030
    %v1032 = vsel %vm1029, %v1031, %v1027
    %v1033 = vmul.f32 1.0, %v1032
    %v1034 = vrcp.pop %v822
    %v1035 = vmul.f32 %v822, %v1034
    %v1036 = vsub.f32 1.0, %v1035
    %v1037 = vmul.f32 %v1034, %v1036
    %v1038 = vadd.f32 %v1034, %v1037
    %vm1039 = vweird.f32 %v822
    %vm1040 = vweird.f32 %v1034
    %vm1041 = vmor %vm1039, %vm1040
    %v1042 = vsel %vm1041, %v1034, %v1038
    %v1043 = vand.u32 2147483647, %v822
    %vm1044 = vcmp.eq.f32.partialorder %v1043, 8.507059e+37
    %v1045 = vand.u32 %v822, 2147483648
    %v1046 = vor.u32 1.1754944e-38, %v1045
    %v1047 = vsel %vm1044, %v1046, %v1042
    %v1048 = vmul.f32 1.0, %v1047
    %v1049 = vrcp.pop %v823
    %v1050 = vmul.f32 %v823, %v1049
    %v1051 = vsub.f32 1.0, %v1050
    %v1052 = vmul.f32 %v1049, %v1051
    %v1053 = vadd.f32 %v1049, %v1052
    %vm1054 = vweird.f32 %v823
    %vm1055 = vweird.f32 %v1049
    %vm1056 = vmor %vm1054, %vm1055
    %v1057 = vsel %vm1056, %v1049, %v1053
    %v1058 = vand.u32 2147483647, %v823
    %vm1059 = vcmp.eq.f32.partialorder %v1058, 8.507059e+37
    %v1060 = vand.u32 %v823, 2147483648
    %v1061 = vor.u32 1.1754944e-38, %v1060
    %v1062 = vsel %vm1059, %v1061, %v1057
    %v1063 = vmul.f32 1.0, %v1062
    %v1080 = vlaneseq
    %v1081 = vand.u32 %v1080, 127
    %v1082 = vperm.slane %v838, %v1081
    %v1083 = vadd.s32 %v1081, 4294967288
    %v1084 = vperm.slane %v853, %v1083
    %vm1085 = vcmask 130112
    %v1086 = vsel %vm1085, %v1084, %v1082
    %v1087 = vadd.s32 %v1081, 4294967280
    %v1088 = vperm.slane %v868, %v1087
    %vm1089 = vcmask 195712
    %v1090 = vsel %vm1089, %v1088, %v1086
    %v1091 = vadd.s32 %v1081, 4294967272
    %v1092 = vperm.slane %v883, %v1091
    %vm1093 = vcmask 261312
    %v1094 = vsel %vm1093, %v1092, %v1090
    %v1095 = vadd.s32 %v1081, 4294967264
    %v1096 = vperm.slane %v898, %v1095
    %vm1097 = vcmask 326912
    %v1098 = vsel %vm1097, %v1096, %v1094
    %v1099 = vadd.s32 %v1081, 4294967256
    %v1100 = vperm.slane %v913, %v1099
    %vm1101 = vcmask 392512
    %v1102 = vsel %vm1101, %v1100, %v1098
    %v1103 = vadd.s32 %v1081, 4294967248
    %v1104 = vperm.slane %v928, %v1103
    %vm1105 = vcmask 458112
    %v1106 = vsel %vm1105, %v1104, %v1102
    %v1107 = vadd.s32 %v1081, 4294967240
    %v1108 = vperm.slane %v943, %v1107
    %vm1109 = vcmask 523712
    %v1110 = vsel %vm1109, %v1108, %v1106
    %v1111 = vadd.s32 %v1081, 4294967232
    %v1112 = vperm.slane %v958, %v1111
    %vm1113 = vcmask 589312
    %v1114 = vsel %vm1113, %v1112, %v1110
    %v1115 = vadd.s32 %v1081, 4294967224
    %v1116 = vperm.slane %v973, %v1115
    %vm1117 = vcmask 654912
    %v1118 = vsel %vm1117, %v1116, %v1114
    %v1119 = vadd.s32 %v1081, 4294967216
    %v1120 = vperm.slane %v988, %v1119
    %vm1121 = vcmask 720512
    %v1122 = vsel %vm1121, %v1120, %v1118
    %v1123 = vadd.s32 %v1081, 4294967208
    %v1124 = vperm.slane %v1003, %v1123
    %vm1125 = vcmask 786112
    %v1126 = vsel %vm1125, %v1124, %v1122
    %v1127 = vadd.s32 %v1081, 4294967200
    %v1128 = vperm.slane %v1018, %v1127
    %vm1129 = vcmask 851712
    %v1130 = vsel %vm1129, %v1128, %v1126
    %v1131 = vadd.s32 %v1081, 4294967192
    %v1132 = vperm.slane %v1033, %v1131
    %vm1133 = vcmask 917312
    %v1134 = vsel %vm1133, %v1132, %v1130
    %v1135 = vadd.s32 %v1081, 4294967184
    %v1136 = vperm.slane %v1048, %v1135
    %vm1137 = vcmask 982912
    %v1138 = vsel %vm1137, %v1136, %v1134
    %v1139 = vadd.s32 %v1081, 4294967176
    %v1140 = vperm.slane %v1063, %v1139
    %vm1141 = vcmask 1048512
    %v1142 = vsel %vm1141, %v1140, %v1138
    %1144 = vst [vmem:[%s4] sm:$0x1] %v1142
    // Predicated region
    $region505: #{mf_forward.1} parent=1 // pred_check
      _
    $region506: #{mf_forward.1} parent=1 // pred_check_branch
      %1146 = sbr.rel (0) target = $region508
    $region507: #{mf_forward.1} parent=1 // pred_region
      _
    $region508: #{mf_forward.1} parent=1 // pred_fallthru
      _
    // Predicated region
    $region509: #{mf_forward.1} parent=1 // pred_check
      _
    $region510: #{mf_forward.1} parent=1 // pred_check_branch
      %1148 = sbr.rel (0) target = $region512
    $region511: #{mf_forward.1} parent=1 // pred_region
      _
    $region512: #{mf_forward.1} parent=1 // pred_fallthru
      _
    %1149 = vsyncpa [#allocation9], 1
    %1150 = vsyncpa [#allocation11], 1
  %1151 = vsyncmov [#allocation4]
  %s1152 = vpop.sfrf %1151
  %p1153 = scmp.eq.s32.totalorder %s1152, 0
  %p1154 = pneg %p1153
  %1156 = shalt.err (%p1154)
  %s1157 = scalar_lea.sflag [#allocation4], 1
  %1158 = vsyncmov %s1157
  %s1159 = vpop.sfrf %1158
  %p1160 = scmp.eq.s32.totalorder %s1159, 0
  %p1161 = pneg %p1160
  %1163 = shalt.err (%p1161)
  %s1164 = scalar_lea.sflag [#allocation4], 2
  %1165 = vsyncmov %s1164
  %s1166 = vpop.sfrf %1165
  %p1167 = scmp.eq.s32.totalorder %s1166, 0
  %p1168 = pneg %p1167
  %1170 = shalt.err (%p1168)
  %s1171 = scalar_lea.sflag [#allocation4], 3
  %1172 = vsyncmov %s1171
  %s1173 = vpop.sfrf %1172
  %p1174 = scmp.eq.s32.totalorder %s1173, 0
  %p1175 = pneg %p1174
  %1177 = shalt.err (%p1175)

</llo_original>
